<compile_context>
chip_gen: v7x
topology: tpu7x:2x2x1
jax: 0.10.0
libtpu: 0.0.40
codegen_flags: <defaults>
</compile_context>

<pallas_src>
import functools

import jax
import jax.numpy as jnp
import numpy as np
from jax.experimental import pallas as pl
from jax.experimental.pallas import tpu as pltpu

EPS = 1e-5
_VMEM = pl.BlockSpec(memory_space=pltpu.MemorySpace.VMEM)


# ---------------------------------------------------------------------------
# The single fused kernel.
#
# In-kernel layout: every activation is a 2-D (rows, lanes) f32 matrix with
#   rows  = (h, b)   height-major  -> a conv's di row-shift is ONE slice
#   lanes = (w, c)   channel-fast  -> the feature axis sits on TPU lanes
# All parameters live in the packed (R, 128) buffer p_ref, sliced at static,
# 8-row-aligned offsets (lane offset always 0 -> no unaligned lane reads).
# ---------------------------------------------------------------------------
def _fused_forward_kernel(B, H, W, C, out_dim, offs, x_ref, p_ref, o_ref):
    def par(name, r, c):
        o = offs[name]
        return p_ref[o:o + r, 0:c]

    x = x_ref[...]                                      # (H*B, W*C)

    # ---- BatchNorm2d(3): training-mode batch stats, single pass ------------
    n = float(B * H * W)
    colsum = jnp.sum(x, axis=0, keepdims=True)          # (1, W*C)
    colsq = jnp.sum(x * x, axis=0, keepdims=True)       # (1, W*C)
    r_red = par("r_red", W * C, C)                      # 0/1 reduce-over-width
    s = jnp.dot(colsum, r_red, preferred_element_type=jnp.float32)
    ssq = jnp.dot(colsq, r_red, preferred_element_type=jnp.float32)
    mean = s / n
    var = jnp.maximum(ssq / n - mean * mean, 0.0)       # clamp f32 cancellation
    scale = par("gamma", 1, C) * jax.lax.rsqrt(var + EPS)       # (1, C)
    shift = par("beta", 1, C) - mean * scale                    # (1, C)
    # broadcast scale over the (w, c) lane axis via one tiny replication
    # matmul (no lane concat); shift is folded into conv1's bias below.
    scale_w = jnp.dot(scale, par("r_rep", C, W * C),
                      preferred_element_type=jnp.float32)       # (1, W*C)
    xs = x * scale_w

    # ---- 2x2 valid conv + ReLU: two banded-weight MXU matmuls --------------
    def conv2x2_relu(a, hin, w0, w1, bias_t):
        oh = hin - 1
        p = (jnp.dot(a[0:oh * B, :], w0, preferred_element_type=jnp.float32) +
             jnp.dot(a[B:(1 + oh) * B, :], w1, preferred_element_type=jnp.float32))
        return jnp.maximum(p + bias_t, 0.0)

    ow1 = W - 1
    bias1 = par("b1t", 1, ow1 * 16) + jnp.dot(
        shift, par("w1sum_rep", C, ow1 * 16), preferred_element_type=jnp.float32)
    c1 = conv2x2_relu(xs, H,
                      par("w1b0", W * C, ow1 * 16),
                      par("w1b1", W * C, ow1 * 16), bias1)   # ((H-1)*B, (W-1)*16)
    h1, w1s = H - 1, W - 1

    # ---- MaxPool2d((2,2)) ---------------------------------------------------
    ph, pw = h1 // 2, w1s // 2
    # row half: spatial loop only (in (h,b) layout windows never cross batches)
    parts = [jnp.maximum(c1[(2 * r) * B:(2 * r + 1) * B, :],
                         c1[(2 * r + 1) * B:(2 * r + 2) * B, :]) for r in range(ph)]
    hp = parts[0] if ph == 1 else jnp.concatenate(parts, axis=0)   # (ph*B, w1s*16)
    # width half: even/odd 16-lane-group selection via 0/1 matmuls (idle MXU)
    pooled = jnp.maximum(
        jnp.dot(hp, par("s_even", w1s * 16, pw * 16),
                preferred_element_type=jnp.float32),
        jnp.dot(hp, par("s_odd", w1s * 16, pw * 16),
                preferred_element_type=jnp.float32))               # (ph*B, pw*16)

    # ---- conv2 (16->32) + ReLU, conv3 (32->64) + ReLU -----------------------
    c2 = conv2x2_relu(pooled, ph,
                      par("w2b0", pw * 16, (pw - 1) * 32),
                      par("w2b1", pw * 16, (pw - 1) * 32),
                      par("b2t", 1, (pw - 1) * 32))
    c3 = conv2x2_relu(c2, ph - 1,
                      par("w3b0", (pw - 1) * 32, (pw - 2) * 64),
                      par("w3b1", (pw - 1) * 32, (pw - 2) * 64),
                      par("b3t", 1, (pw - 2) * 64))
    # For 7x7 inputs the conv stack collapses to 1x1, so c3 is already the
    # (B, 64) flat feature matrix (NCHW flatten == identity here).

    # ---- MLP head: Linear(64, 64) -> Tanh -> Linear(64, out_dim) -----------
    hmid = jnp.tanh(jnp.dot(c3, par("wl1", 64, 64),
                            preferred_element_type=jnp.float32) + par("bl1", 1, 64))
    o_ref[...] = (jnp.dot(hmid, par("wl2", 64, out_dim),
                          preferred_element_type=jnp.float32) + par("bl2", 1, out_dim))


# ---------------------------------------------------------------------------
# forward wrapper (non-critic path)
# ---------------------------------------------------------------------------
def conv_mlp_forward(packed, obss, *, offs, out_dim):
    x = obss
    if x.ndim < 4:                       # mirrors x.unsqueeze(0)
        x = x[None]
    B, H, W, C = x.shape
    oh3, ow3 = (H - 1) // 2 - 2, (W - 1) // 2 - 2
    assert C == 3 and (oh3, ow3) == (1, 1), "input_dim=64 assumes 7x7x3 observations"
    # TODO(synk): for larger spatial outputs, fold the NCHW flatten permutation
    # into wl1's row order at parameter-build time.

    # height-major row packing: rows = (h, b), lanes = (w, c). Wrapper-side
    # layout plumbing on a ~2 KB array; makes every in-kernel conv row-slab a
    # single contiguous slice, independent of batch size.
    x2 = jnp.transpose(x, (1, 0, 2, 3)).reshape(H * B, W * C)

    kernel = functools.partial(_fused_forward_kernel, B, H, W, C, out_dim, offs)
    return pl.pallas_call(
        kernel,
        out_shape=jax.ShapeDtypeStruct((B, out_dim), jnp.float32),
        in_specs=[_VMEM, _VMEM],          # 2 DMAs total: activations + packed params
        out_specs=_VMEM,
    )(x2, packed)


# ---------------------------------------------------------------------------
# deterministic parameter build: banded conv weights, BN/pool structure
# matrices, and a single packed (R, 128) parameter buffer.
# ---------------------------------------------------------------------------
def _pack(entries):
    offs, blocks, row = {}, [], 0
    for name, a in entries:
        a = np.asarray(a, np.float32)
        if a.ndim == 1:
            a = a[None, :]
        r, c = a.shape
        assert c <= 128, (name, a.shape)
        rpad = -(-r // 8) * 8                     # 8-row-aligned slots
        blk = np.zeros((rpad, 128), np.float32)
        blk[:r, :c] = a
        offs[name] = row
        blocks.append(blk)
        row += rpad
    return np.concatenate(blocks, axis=0), offs


def _banded_pair(wk, win):
    """wk: (2, 2, cin, cout) -> [M_di0, M_di1], each (win*cin, (win-1)*cout).

    M_di[w_in*cin + ci, ow*cout + co] = wk[di, w_in - ow, ci, co] when
    w_in - ow in {0, 1}, else 0 -- so `slab_di @ M_di` computes every output
    column of a 2x2 stride-1 valid conv for that di in one matmul.
    """
    _, _, cin, cout = wk.shape
    own = win - 1
    mats = []
    for di in range(2):
        m = np.zeros((win * cin, own * cout), np.float32)
        for ow in range(own):
            for dj in range(2):
                m[(ow + dj) * cin:(ow + dj + 1) * cin,
                  ow * cout:(ow + 1) * cout] = wk[di, dj]
        mats.append(m)
    return mats


def make_params(key, input_dim, out_dim, H=7, W=7, C=3):
    ks = jax.random.split(key, 5)

    def row_normal(k, shape):    # init_params: N(0,1) rows, unit L2 norm, bias 0
        w = np.asarray(jax.random.normal(k, shape, jnp.float32))
        return w / np.sqrt((w * w).sum(axis=1, keepdims=True))

    # conv weights stored (di, dj, cin, cout)
    w1 = 0.25 * np.asarray(jax.random.normal(ks[0], (2, 2, C, 16), jnp.float32))
    w2 = 0.125 * np.asarray(jax.random.normal(ks[1], (2, 2, 16, 32), jnp.float32))
    w3 = 0.09 * np.asarray(jax.random.normal(ks[2], (2, 2, 32, 64), jnp.float32))
    b1 = np.zeros(16, np.float32)
    b2 = np.zeros(32, np.float32)
    b3 = np.zeros(64, np.float32)

    w1s = W - 1
    pw = w1s // 2
    flat_dim = 64 * ((H - 1) // 2 - 2) * ((W - 1) // 2 - 2)
    assert input_dim == flat_dim == 64, "MLP head expects the 7x7 conv-stack output"

    # banded conv matrices (2 per conv: di = 0, 1)
    w1b0, w1b1 = _banded_pair(w1, W)
    w2b0, w2b1 = _banded_pair(w2, pw)
    w3b0, w3b1 = _banded_pair(w3, pw - 1)

    # BN structure matrices: reduce-over-width and replicate-over-width (0/1)
    r_red = np.zeros((W * C, C), np.float32)
    for w in range(W):
        r_red[w * C:(w + 1) * C, :] = np.eye(C, dtype=np.float32)
    r_rep = np.ascontiguousarray(r_red.T)
    # conv1 of a spatially-constant per-channel shift == shift @ sum_{di,dj} W1
    w1sum_rep = np.tile(w1.sum(axis=(0, 1)), (1, w1s))          # (C, (W-1)*16)

    # width-maxpool selection matrices (even / odd 16-lane channel groups)
    s_even = np.zeros((w1s * 16, pw * 16), np.float32)
    s_odd = np.zeros_like(s_even)
    eye16 = np.eye(16, dtype=np.float32)
    for q in range(pw):
        s_even[(2 * q) * 16:(2 * q + 1) * 16, q * 16:(q + 1) * 16] = eye16
        s_odd[(2 * q + 1) * 16:(2 * q + 2) * 16, q * 16:(q + 1) * 16] = eye16

    entries = [
        ("gamma", np.ones((1, C), np.float32)),      # in_fn.weight = 1
        ("beta", np.zeros((1, C), np.float32)),      # in_fn.bias = 0
        ("r_red", r_red), ("r_rep", r_rep),
        ("w1sum_rep", w1sum_rep),
        ("b1t", np.tile(b1, w1s)[None, :]),
        ("w1b0", w1b0), ("w1b1", w1b1),
        ("s_even", s_even), ("s_odd", s_odd),
        ("w2b0", w2b0), ("w2b1", w2b1),
        ("b2t", np.tile(b2, pw - 1)[None, :]),
        ("w3b0", w3b0), ("w3b1", w3b1),
        ("b3t", np.tile(b3, pw - 2)[None, :]),
        ("wl1", row_normal(ks[3], (64, input_dim)).T),   # nn.Linear: x @ W.T
        ("bl1", np.zeros((1, 64), np.float32)),
        ("wl2", row_normal(ks[4], (out_dim, 64)).T),
        ("bl2", np.zeros((1, out_dim), np.float32)),
    ]
    packed, offs = _pack(entries)
    return jnp.asarray(packed), offs


if __name__ == "__main__":
    # 7x7x3 observations (minigrid-style): conv stack -> 64*1*1 = 64 features,
    # so input_dim = 64; choose out_dim = 5.
    B, H, W = 2, 7, 7
    input_dim, out_dim = 64, 5

    key = jax.random.PRNGKey(0)
    k_params, k_obs = jax.random.split(key)
    packed, offs = make_params(k_params, input_dim, out_dim, H=H, W=W, C=3)
    obss = jax.random.uniform(k_obs, (B, H, W, 3), jnp.float32)

    fwd = jax.jit(functools.partial(conv_mlp_forward, offs=offs, out_dim=out_dim))
    out = jax.block_until_ready(fwd(packed, obss))
    assert out.shape == (B, out_dim), out.shape
    assert jnp.all(jnp.isfinite(out))
    print("KERNEL_OK")
</pallas_src>

<mosaic_0001>
module attributes {stable_mosaic.version = 11 : i64} {
  func.func @_fused_forward_kernel(%arg0: memref<14x21xf32, #tpu.memory_space<vmem>>, %arg1: memref<688x128xf32, #tpu.memory_space<vmem>>, %arg2: memref<2x5xf32, #tpu.memory_space<vmem>>) attributes {dimension_semantics = [], scalar_prefetch = 0 : i64, scratch_operands = 0 : i64, tpu.core_type = #tpu.core_type<tc>} {
    %c0 = arith.constant 0 : index
    %c0_0 = arith.constant 0 : index
    %0 = vector.load %arg0[%c0, %c0_0] : memref<14x21xf32, #tpu.memory_space<vmem>>, vector<14x21xf32>
    %cst = arith.constant dense<0.000000e+00> : vector<21xf32>
    %1 = vector.multi_reduction <add>, %0, %cst [0] : vector<14x21xf32> to vector<21xf32>
    %2 = vector.shape_cast %1 : vector<21xf32> to vector<1x21xf32>
    %3 = arith.mulf %0, %0 : vector<14x21xf32>
    %cst_1 = arith.constant dense<0.000000e+00> : vector<21xf32>
    %4 = vector.multi_reduction <add>, %3, %cst_1 [0] : vector<14x21xf32> to vector<21xf32>
    %5 = vector.shape_cast %4 : vector<21xf32> to vector<1x21xf32>
    %c16 = arith.constant 16 : index
    %c0_2 = arith.constant 0 : index
    %6 = vector.load %arg1[%c16, %c0_2] : memref<688x128xf32, #tpu.memory_space<vmem>>, vector<21x3xf32>
    %cst_3 = arith.constant dense<0.000000e+00> : vector<1x3xf32>
    %7 = tpu.matmul %2, %6, %cst_3 {dimension_numbers = #tpu.dot_dimension_numbers<[1], [0], [0], [1], [0, 0, 1, 1], [], []>} : vector<1x21xf32>, vector<21x3xf32>, vector<1x3xf32> -> vector<1x3xf32>
    %cst_4 = arith.constant dense<0.000000e+00> : vector<1x3xf32>
    %8 = tpu.matmul %5, %6, %cst_4 {dimension_numbers = #tpu.dot_dimension_numbers<[1], [0], [0], [1], [0, 0, 1, 1], [], []>} : vector<1x21xf32>, vector<21x3xf32>, vector<1x3xf32> -> vector<1x3xf32>
    %cst_5 = arith.constant 9.800000e+01 : f32
    %9 = vector.broadcast %cst_5 : f32 to vector<1x3xf32>
    %10 = arith.divf %7, %9 : vector<1x3xf32>
    %cst_6 = arith.constant 9.800000e+01 : f32
    %11 = vector.broadcast %cst_6 : f32 to vector<1x3xf32>
    %12 = arith.divf %8, %11 : vector<1x3xf32>
    %13 = arith.mulf %10, %10 : vector<1x3xf32>
    %14 = arith.subf %12, %13 : vector<1x3xf32>
    %cst_7 = arith.constant 0.000000e+00 : f32
    %15 = vector.broadcast %cst_7 : f32 to vector<1x3xf32>
    %16 = arith.maximumf %14, %15 : vector<1x3xf32>
    %c0_8 = arith.constant 0 : index
    %c0_9 = arith.constant 0 : index
    %17 = vector.load %arg1[%c0_8, %c0_9] : memref<688x128xf32, #tpu.memory_space<vmem>>, vector<1x3xf32>
    %cst_10 = arith.constant 9.99999974E-6 : f32
    %18 = vector.broadcast %cst_10 : f32 to vector<1x3xf32>
    %19 = arith.addf %16, %18 : vector<1x3xf32>
    %20 = math.rsqrt %19 : vector<1x3xf32>
    %21 = arith.mulf %17, %20 : vector<1x3xf32>
    %c8 = arith.constant 8 : index
    %c0_11 = arith.constant 0 : index
    %22 = vector.load %arg1[%c8, %c0_11] : memref<688x128xf32, #tpu.memory_space<vmem>>, vector<1x3xf32>
    %23 = arith.mulf %10, %21 : vector<1x3xf32>
    %24 = arith.subf %22, %23 : vector<1x3xf32>
    %c40 = arith.constant 40 : index
    %c0_12 = arith.constant 0 : index
    %25 = vector.load %arg1[%c40, %c0_12] : memref<688x128xf32, #tpu.memory_space<vmem>>, vector<3x21xf32>
    %cst_13 = arith.constant dense<0.000000e+00> : vector<1x21xf32>
    %26 = tpu.matmul %21, %25, %cst_13 {dimension_numbers = #tpu.dot_dimension_numbers<[1], [0], [0], [1], [0, 0, 1, 1], [], []>} : vector<1x3xf32>, vector<3x21xf32>, vector<1x21xf32> -> vector<1x21xf32>
    %27 = vector.broadcast %26 : vector<1x21xf32> to vector<14x21xf32>
    %28 = arith.mulf %0, %27 : vector<14x21xf32>
    %c56 = arith.constant 56 : index
    %c0_14 = arith.constant 0 : index
    %29 = vector.load %arg1[%c56, %c0_14] : memref<688x128xf32, #tpu.memory_space<vmem>>, vector<1x96xf32>
    %c48 = arith.constant 48 : index
    %c0_15 = arith.constant 0 : index
    %30 = vector.load %arg1[%c48, %c0_15] : memref<688x128xf32, #tpu.memory_space<vmem>>, vector<3x96xf32>
    %cst_16 = arith.constant dense<0.000000e+00> : vector<1x96xf32>
    %31 = tpu.matmul %24, %30, %cst_16 {dimension_numbers = #tpu.dot_dimension_numbers<[1], [0], [0], [1], [0, 0, 1, 1], [], []>} : vector<1x3xf32>, vector<3x96xf32>, vector<1x96xf32> -> vector<1x96xf32>
    %32 = arith.addf %29, %31 : vector<1x96xf32>
    %c64 = arith.constant 64 : index
    %c0_17 = arith.constant 0 : index
    %33 = vector.load %arg1[%c64, %c0_17] : memref<688x128xf32, #tpu.memory_space<vmem>>, vector<21x96xf32>
    %c88 = arith.constant 88 : index
    %c0_18 = arith.constant 0 : index
    %34 = vector.load %arg1[%c88, %c0_18] : memref<688x128xf32, #tpu.memory_space<vmem>>, vector<21x96xf32>
    %35 = vector.extract_strided_slice %28 {offsets = [0, 0], sizes = [12, 21], strides = [1, 1]} : vector<14x21xf32> to vector<12x21xf32>
    %cst_19 = arith.constant dense<0.000000e+00> : vector<12x96xf32>
    %36 = tpu.matmul %35, %33, %cst_19 {dimension_numbers = #tpu.dot_dimension_numbers<[1], [0], [0], [1], [0, 0, 1, 1], [], []>} : vector<12x21xf32>, vector<21x96xf32>, vector<12x96xf32> -> vector<12x96xf32>
    %37 = vector.extract_strided_slice %28 {offsets = [2, 0], sizes = [12, 21], strides = [1, 1]} : vector<14x21xf32> to vector<12x21xf32>
    %cst_20 = arith.constant dense<0.000000e+00> : vector<12x96xf32>
    %38 = tpu.matmul %37, %34, %cst_20 {dimension_numbers = #tpu.dot_dimension_numbers<[1], [0], [0], [1], [0, 0, 1, 1], [], []>} : vector<12x21xf32>, vector<21x96xf32>, vector<12x96xf32> -> vector<12x96xf32>
    %39 = arith.addf %36, %38 : vector<12x96xf32>
    %40 = vector.broadcast %32 : vector<1x96xf32> to vector<12x96xf32>
    %41 = arith.addf %39, %40 : vector<12x96xf32>
    %cst_21 = arith.constant 0.000000e+00 : f32
    %42 = vector.broadcast %cst_21 : f32 to vector<12x96xf32>
    %43 = arith.maximumf %41, %42 : vector<12x96xf32>
    %44 = vector.extract_strided_slice %43 {offsets = [0, 0], sizes = [2, 96], strides = [1, 1]} : vector<12x96xf32> to vector<2x96xf32>
    %45 = vector.extract_strided_slice %43 {offsets = [2, 0], sizes = [2, 96], strides = [1, 1]} : vector<12x96xf32> to vector<2x96xf32>
    %46 = arith.maximumf %44, %45 : vector<2x96xf32>
    %47 = vector.extract_strided_slice %43 {offsets = [4, 0], sizes = [2, 96], strides = [1, 1]} : vector<12x96xf32> to vector<2x96xf32>
    %48 = vector.extract_strided_slice %43 {offsets = [6, 0], sizes = [2, 96], strides = [1, 1]} : vector<12x96xf32> to vector<2x96xf32>
    %49 = arith.maximumf %47, %48 : vector<2x96xf32>
    %50 = vector.extract_strided_slice %43 {offsets = [8, 0], sizes = [2, 96], strides = [1, 1]} : vector<12x96xf32> to vector<2x96xf32>
    %51 = vector.extract_strided_slice %43 {offsets = [10, 0], sizes = [2, 96], strides = [1, 1]} : vector<12x96xf32> to vector<2x96xf32>
    %52 = arith.maximumf %50, %51 : vector<2x96xf32>
    %53 = tpu.concatenate %46, %49, %52 in 0 : vector<2x96xf32>, vector<2x96xf32>, vector<2x96xf32> -> vector<6x96xf32>
    %c112 = arith.constant 112 : index
    %c0_22 = arith.constant 0 : index
    %54 = vector.load %arg1[%c112, %c0_22] : memref<688x128xf32, #tpu.memory_space<vmem>>, vector<96x48xf32>
    %cst_23 = arith.constant dense<0.000000e+00> : vector<6x48xf32>
    %55 = tpu.matmul %53, %54, %cst_23 {dimension_numbers = #tpu.dot_dimension_numbers<[1], [0], [0], [1], [0, 0, 1, 1], [], []>} : vector<6x96xf32>, vector<96x48xf32>, vector<6x48xf32> -> vector<6x48xf32>
    %c208 = arith.constant 208 : index
    %c0_24 = arith.constant 0 : index
    %56 = vector.load %arg1[%c208, %c0_24] : memref<688x128xf32, #tpu.memory_space<vmem>>, vector<96x48xf32>
    %cst_25 = arith.constant dense<0.000000e+00> : vector<6x48xf32>
    %57 = tpu.matmul %53, %56, %cst_25 {dimension_numbers = #tpu.dot_dimension_numbers<[1], [0], [0], [1], [0, 0, 1, 1], [], []>} : vector<6x96xf32>, vector<96x48xf32>, vector<6x48xf32> -> vector<6x48xf32>
    %58 = arith.maximumf %55, %57 : vector<6x48xf32>
    %c304 = arith.constant 304 : index
    %c0_26 = arith.constant 0 : index
    %59 = vector.load %arg1[%c304, %c0_26] : memref<688x128xf32, #tpu.memory_space<vmem>>, vector<48x64xf32>
    %c352 = arith.constant 352 : index
    %c0_27 = arith.constant 0 : index
    %60 = vector.load %arg1[%c352, %c0_27] : memref<688x128xf32, #tpu.memory_space<vmem>>, vector<48x64xf32>
    %c400 = arith.constant 400 : index
    %c0_28 = arith.constant 0 : index
    %61 = vector.load %arg1[%c400, %c0_28] : memref<688x128xf32, #tpu.memory_space<vmem>>, vector<1x64xf32>
    %62 = vector.extract_strided_slice %58 {offsets = [0, 0], sizes = [4, 48], strides = [1, 1]} : vector<6x48xf32> to vector<4x48xf32>
    %cst_29 = arith.constant dense<0.000000e+00> : vector<4x64xf32>
    %63 = tpu.matmul %62, %59, %cst_29 {dimension_numbers = #tpu.dot_dimension_numbers<[1], [0], [0], [1], [0, 0, 1, 1], [], []>} : vector<4x48xf32>, vector<48x64xf32>, vector<4x64xf32> -> vector<4x64xf32>
    %64 = vector.extract_strided_slice %58 {offsets = [2, 0], sizes = [4, 48], strides = [1, 1]} : vector<6x48xf32> to vector<4x48xf32>
    %cst_30 = arith.constant dense<0.000000e+00> : vector<4x64xf32>
    %65 = tpu.matmul %64, %60, %cst_30 {dimension_numbers = #tpu.dot_dimension_numbers<[1], [0], [0], [1], [0, 0, 1, 1], [], []>} : vector<4x48xf32>, vector<48x64xf32>, vector<4x64xf32> -> vector<4x64xf32>
    %66 = arith.addf %63, %65 : vector<4x64xf32>
    %67 = vector.broadcast %61 : vector<1x64xf32> to vector<4x64xf32>
    %68 = arith.addf %66, %67 : vector<4x64xf32>
    %cst_31 = arith.constant 0.000000e+00 : f32
    %69 = vector.broadcast %cst_31 : f32 to vector<4x64xf32>
    %70 = arith.maximumf %68, %69 : vector<4x64xf32>
    %c408 = arith.constant 408 : index
    %c0_32 = arith.constant 0 : index
    %71 = vector.load %arg1[%c408, %c0_32] : memref<688x128xf32, #tpu.memory_space<vmem>>, vector<64x64xf32>
    %c472 = arith.constant 472 : index
    %c0_33 = arith.constant 0 : index
    %72 = vector.load %arg1[%c472, %c0_33] : memref<688x128xf32, #tpu.memory_space<vmem>>, vector<64x64xf32>
    %c536 = arith.constant 536 : index
    %c0_34 = arith.constant 0 : index
    %73 = vector.load %arg1[%c536, %c0_34] : memref<688x128xf32, #tpu.memory_space<vmem>>, vector<1x64xf32>
    %74 = vector.extract_strided_slice %70 {offsets = [0, 0], sizes = [2, 64], strides = [1, 1]} : vector<4x64xf32> to vector<2x64xf32>
    %cst_35 = arith.constant dense<0.000000e+00> : vector<2x64xf32>
    %75 = tpu.matmul %74, %71, %cst_35 {dimension_numbers = #tpu.dot_dimension_numbers<[1], [0], [0], [1], [0, 0, 1, 1], [], []>} : vector<2x64xf32>, vector<64x64xf32>, vector<2x64xf32> -> vector<2x64xf32>
    %76 = vector.extract_strided_slice %70 {offsets = [2, 0], sizes = [2, 64], strides = [1, 1]} : vector<4x64xf32> to vector<2x64xf32>
    %cst_36 = arith.constant dense<0.000000e+00> : vector<2x64xf32>
    %77 = tpu.matmul %76, %72, %cst_36 {dimension_numbers = #tpu.dot_dimension_numbers<[1], [0], [0], [1], [0, 0, 1, 1], [], []>} : vector<2x64xf32>, vector<64x64xf32>, vector<2x64xf32> -> vector<2x64xf32>
    %78 = arith.addf %75, %77 : vector<2x64xf32>
    %79 = vector.broadcast %73 : vector<1x64xf32> to vector<2x64xf32>
    %80 = arith.addf %78, %79 : vector<2x64xf32>
    %cst_37 = arith.constant 0.000000e+00 : f32
    %81 = vector.broadcast %cst_37 : f32 to vector<2x64xf32>
    %82 = arith.maximumf %80, %81 : vector<2x64xf32>
    %c544 = arith.constant 544 : index
    %c0_38 = arith.constant 0 : index
    %83 = vector.load %arg1[%c544, %c0_38] : memref<688x128xf32, #tpu.memory_space<vmem>>, vector<64x64xf32>
    %cst_39 = arith.constant dense<0.000000e+00> : vector<2x64xf32>
    %84 = tpu.matmul %82, %83, %cst_39 {dimension_numbers = #tpu.dot_dimension_numbers<[1], [0], [0], [1], [0, 0, 1, 1], [], []>} : vector<2x64xf32>, vector<64x64xf32>, vector<2x64xf32> -> vector<2x64xf32>
    %c608 = arith.constant 608 : index
    %c0_40 = arith.constant 0 : index
    %85 = vector.load %arg1[%c608, %c0_40] : memref<688x128xf32, #tpu.memory_space<vmem>>, vector<1x64xf32>
    %86 = vector.broadcast %85 : vector<1x64xf32> to vector<2x64xf32>
    %87 = arith.addf %84, %86 : vector<2x64xf32>
    %88 = math.tanh %87 : vector<2x64xf32>
    %c616 = arith.constant 616 : index
    %c0_41 = arith.constant 0 : index
    %89 = vector.load %arg1[%c616, %c0_41] : memref<688x128xf32, #tpu.memory_space<vmem>>, vector<64x5xf32>
    %cst_42 = arith.constant dense<0.000000e+00> : vector<2x5xf32>
    %90 = tpu.matmul %88, %89, %cst_42 {dimension_numbers = #tpu.dot_dimension_numbers<[1], [0], [0], [1], [0, 0, 1, 1], [], []>} : vector<2x64xf32>, vector<64x5xf32>, vector<2x5xf32> -> vector<2x5xf32>
    %c680 = arith.constant 680 : index
    %c0_43 = arith.constant 0 : index
    %91 = vector.load %arg1[%c680, %c0_43] : memref<688x128xf32, #tpu.memory_space<vmem>>, vector<1x5xf32>
    %92 = vector.broadcast %91 : vector<1x5xf32> to vector<2x5xf32>
    %93 = arith.addf %90, %92 : vector<2x5xf32>
    %c0_44 = arith.constant 0 : index
    %c0_45 = arith.constant 0 : index
    %94 = vector.load %arg2[%c0_44, %c0_45] : memref<2x5xf32, #tpu.memory_space<vmem>>, vector<2x5xf32>
    tpu.vector_store %arg2[%c0_44, %c0_45], %93 {strides = array<i32>} : memref<2x5xf32, #tpu.memory_space<vmem>>, vector<2x5xf32>,
    return
  }
}

</mosaic_0001>

<llo_original>
// kernel: conv_mlp_forward.1
$region0: #{conv_mlp_forward.1}
  #allocation0 [shape = 'u32[]', space=smem, size = 0x4, offset = 0x4, fixed_abs, tag = 'smem constant byte address 0x4 - core index']
  #allocation1 [shape = 'u32[144,128]{1,0:T(1,128)}', space=vmem, size = 0x12000, scoped, tag = 'internal scratch']
  %s0 = inlined_call_operand.vmem [shape: f32[14,21], index: 0, kind: input, shape index: {}]
  %s1 = inlined_call_operand.hbm [shape: f32[688,128], index: 1, kind: input, shape index: {}]
  %s2 = inlined_call_operand.hbm [shape: f32[2,5], index: 2, kind: output, shape index: {}]
  %s3 = sld [smem:[#allocation0]]
  $region22: #{conv_mlp_forward.1} parent=0
    _
  %s5 = ssub.s32 1, %s3
  %s6 = scalar_select 0, %s5, %s3
  $region1: #{conv_mlp_forward.1} parent=0
    #allocation2 [shape = 'u8[352256]{0}', space=vmem, size = 0x56000, scoped, tag = 'input window, operand 1, single buffered']
    #allocation3 [shape = 's32[1]{0}', space=sflag, size = 0x4, scoped, tag = 'scoped memory for conv_mlp_forward.1']
    #allocation4 [shape = 's32[1]{0}', space=sflag, size = 0x4, scoped, tag = 'scoped memory for conv_mlp_forward.1']
    #allocation5 [shape = 'u8[1024]{0}', space=vmem, size = 0x400, scoped, tag = 'output window, operand 0, single buffered']
    %7 = vsyncpa [#allocation3], 0
    %8 = vsyncpa [#allocation4], 0
    // Predicated region
    $region2: #{conv_mlp_forward.1} parent=1 // pred_check
      _
    $region3: #{conv_mlp_forward.1} parent=1 // pred_check_branch
      %10 = sbr.rel (0) target = $region5
    $region4: #{conv_mlp_forward.1} parent=1 // pred_region
      _
    $region5: #{conv_mlp_forward.1} parent=1 // pred_fallthru
      _
    // Predicated region
    $region6: #{conv_mlp_forward.1} parent=1 // pred_check
      _
    $region7: #{conv_mlp_forward.1} parent=1 // pred_check_branch
      %12 = sbr.rel (0) target = $region9
    $region8: #{conv_mlp_forward.1} parent=1 // pred_region
      %s14 = ssub.s32 11008, 11008
      %15 = vsyncadd [#allocation3], %s14
      %s16 = sshll.u32 [#allocation2], 4
      %s17 = int_to_ptr.vmem [resolvable:$true] %s16
      %22 = dma.hbm_to_vmem [thread:$0]  %s1, 11008, %s17, [#allocation3], 128, 128, 8
    $region9: #{conv_mlp_forward.1} parent=1 // pred_fallthru
      _
    // Predicated region
    $region10: #{conv_mlp_forward.1} parent=1 // pred_check
      _
    $region11: #{conv_mlp_forward.1} parent=1 // pred_check_branch
      %24 = sbr.rel (0) target = $region13
    $region12: #{conv_mlp_forward.1} parent=1 // pred_region
      %25 = dma.done [#allocation3], 11008
    $region13: #{conv_mlp_forward.1} parent=1 // pred_fallthru
      _
    %v26 = vld [vmem:[%s0] sm:$0xff]
    %v27 = vld [vmem:[%s0 + $0x8] sm:$0x3f]
    %vm28 = vcmask 171008
    %v29 = vsel %vm28, %v26, 0.0
    %vm30 = vcmask 168960
    %v31 = vsel %vm30, %v27, 0.0
    %v32 = vadd.f32 %v29, %v31
    %v33 = vrot.slane %v32, 4
    %v34 = vadd.f32 %v32, %v33
    %v35 = vrot.slane %v34, 2
    %v36 = vadd.f32 %v34, %v35
    %v37 = vrot.slane %v36, 1
    %v38 = vadd.f32 %v36, %v37
    %v39 = vmul.f32 %v26, %v26
    %v40 = vmul.f32 %v27, %v27
    %v41 = vsel %vm28, %v39, 0.0
    %v42 = vsel %vm30, %v40, 0.0
    %v43 = vadd.f32 %v41, %v42
    %v44 = vrot.slane %v43, 4
    %v45 = vadd.f32 %v43, %v44
    %v46 = vrot.slane %v45, 2
    %v47 = vadd.f32 %v45, %v46
    %v48 = vrot.slane %v47, 1
    %v49 = vadd.f32 %v47, %v48
    %v50 = vld [vmem:[#allocation2 + $0x10] sm:$0xff]
    %v51 = vld [vmem:[#allocation2 + $0x18] sm:$0xff]
    %v52 = vld [vmem:[#allocation2 + $0x20] sm:$0x1f]
    %v54 = vsel %vm28, %v38, 0
    %vm56 = vcmask 1044480
    %v58 = vsel %vm56, %v52, 0
    %60 = vmatprep.subr.mxu0 0.0
    %61 = vmatpush1.msra.mxu0 %v50
    %62 = vmatprep.subr.mxu0 0.0
    %63 = vmatpush1.msra.mxu0 %v51
    %64 = vmatprep.subr.mxu0 0.0
    %65 = vmatpush1.msra.mxu0 %v58
    %66 = vmatprep.subr.mxu0 0.0
    %67 = vmatpush1.msra.mxu0 0.0
    %68 = vmatprep.subr.mxu0 0.0
    %69 = vmatpush1.msra.mxu0 0.0
    %70 = vmatprep.subr.mxu0 0.0
    %71 = vmatpush1.msra.mxu0 0.0
    %72 = vmatprep.subr.mxu0 0.0
    %73 = vmatpush1.msra.mxu0 0.0
    %74 = vmatprep.subr.mxu0 0.0
    %75 = vmatpush1.msra.mxu0 0.0
    %76 = vmatprep.subr.mxu0 0.0
    %77 = vmatpush1.msra.mxu0 0.0
    %78 = vmatprep.subr.mxu0 0.0
    %79 = vmatpush1.msra.mxu0 0.0
    %80 = vmatprep.subr.mxu0 0.0
    %81 = vmatpush1.msra.mxu0 0.0
    %82 = vmatprep.subr.mxu0 0.0
    %83 = vmatpush1.msra.mxu0 0.0
    %84 = vmatprep.subr.mxu0 0.0
    %85 = vmatpush1.msra.mxu0 0.0
    %86 = vmatprep.subr.mxu0 0.0
    %87 = vmatpush1.msra.mxu0 0.0
    %88 = vmatprep.subr.mxu0 0.0
    %89 = vmatpush1.msra.mxu0 0.0
    %90 = vmatprep.subr.mxu0 0.0
    %91 = vmatpush1.msra.mxu0 0.0
    %92 = vmatprep.subr.mxu0 0.0
    %93 = vmatpush1.msra.mxu0 0.0
    %94 = vmatprep.subr.mxu0 0.0
    %95 = vmatpush1.msra.mxu0 0.0
    %96 = vmatprep.subr.mxu0 0.0
    %97 = vmatpush1.msra.mxu0 0.0
    %98 = vmatprep.subr.mxu0 0.0
    %99 = vmatpush1.msra.mxu0 0.0
    %100 = vmatprep.subr.mxu0 0.0
    %101 = vmatpush1.msra.mxu0 0.0
    %102 = vmatprep.subr.mxu0 0.0
    %103 = vmatpush1.msra.mxu0 0.0
    %104 = vmatprep.subr.mxu0 0.0
    %105 = vmatpush1.msra.mxu0 0.0
    %106 = vmatprep.subr.mxu0 0.0
    %107 = vmatpush1.msra.mxu0 0.0
    %108 = vmatprep.subr.mxu0 0.0
    %109 = vmatpush1.msra.mxu0 0.0
    %110 = vmatprep.subr.mxu0 0.0
    %111 = vmatpush1.msra.mxu0 0.0
    %112 = vmatprep.subr.mxu0 0.0
    %113 = vmatpush1.msra.mxu0 0.0
    %114 = vmatprep.subr.mxu0 0.0
    %115 = vmatpush1.msra.mxu0 0.0
    %116 = vmatprep.subr.mxu0 0.0
    %117 = vmatpush1.msra.mxu0 0.0
    %118 = vmatprep.subr.mxu0 0.0
    %119 = vmatpush1.msra.mxu0 0.0
    %120 = vmatprep.subr.mxu0 0.0
    %121 = vmatpush1.msra.mxu0 0.0
    %122 = vmatprep.subr.mxu0 0.0
    %123 = vmatpush1.msra.mxu0 0.0
    %124 = vmatprep.mubr.f32.mxu0 0.0
    %125 = vmatmul.mubr.f32.gmra.mrb[0].mxu0 %v54
    %v126 = vpop.f32.mrb[0].mxu0
    %v127 = vadd.f32 0.0, %v126
    %v128 = vpop.f32.mrb[0].mxu0
    %129 = vdwg.mxu0
    %v131 = vsel %vm28, %v49, 0
    %133 = vmatprep.subr.mxu0 0.0
    %134 = vmatpush1.msra.mxu0 %v50
    %135 = vmatprep.subr.mxu0 0.0
    %136 = vmatpush1.msra.mxu0 %v51
    %137 = vmatprep.subr.mxu0 0.0
    %138 = vmatpush1.msra.mxu0 %v58
    %139 = vmatprep.subr.mxu0 0.0
    %140 = vmatpush1.msra.mxu0 0.0
    %141 = vmatprep.subr.mxu0 0.0
    %142 = vmatpush1.msra.mxu0 0.0
    %143 = vmatprep.subr.mxu0 0.0
    %144 = vmatpush1.msra.mxu0 0.0
    %145 = vmatprep.subr.mxu0 0.0
    %146 = vmatpush1.msra.mxu0 0.0
    %147 = vmatprep.subr.mxu0 0.0
    %148 = vmatpush1.msra.mxu0 0.0
    %149 = vmatprep.subr.mxu0 0.0
    %150 = vmatpush1.msra.mxu0 0.0
    %151 = vmatprep.subr.mxu0 0.0
    %152 = vmatpush1.msra.mxu0 0.0
    %153 = vmatprep.subr.mxu0 0.0
    %154 = vmatpush1.msra.mxu0 0.0
    %155 = vmatprep.subr.mxu0 0.0
    %156 = vmatpush1.msra.mxu0 0.0
    %157 = vmatprep.subr.mxu0 0.0
    %158 = vmatpush1.msra.mxu0 0.0
    %159 = vmatprep.subr.mxu0 0.0
    %160 = vmatpush1.msra.mxu0 0.0
    %161 = vmatprep.subr.mxu0 0.0
    %162 = vmatpush1.msra.mxu0 0.0
    %163 = vmatprep.subr.mxu0 0.0
    %164 = vmatpush1.msra.mxu0 0.0
    %165 = vmatprep.subr.mxu0 0.0
    %166 = vmatpush1.msra.mxu0 0.0
    %167 = vmatprep.subr.mxu0 0.0
    %168 = vmatpush1.msra.mxu0 0.0
    %169 = vmatprep.subr.mxu0 0.0
    %170 = vmatpush1.msra.mxu0 0.0
    %171 = vmatprep.subr.mxu0 0.0
    %172 = vmatpush1.msra.mxu0 0.0
    %173 = vmatprep.subr.mxu0 0.0
    %174 = vmatpush1.msra.mxu0 0.0
    %175 = vmatprep.subr.mxu0 0.0
    %176 = vmatpush1.msra.mxu0 0.0
    %177 = vmatprep.subr.mxu0 0.0
    %178 = vmatpush1.msra.mxu0 0.0
    %179 = vmatprep.subr.mxu0 0.0
    %180 = vmatpush1.msra.mxu0 0.0
    %181 = vmatprep.subr.mxu0 0.0
    %182 = vmatpush1.msra.mxu0 0.0
    %183 = vmatprep.subr.mxu0 0.0
    %184 = vmatpush1.msra.mxu0 0.0
    %185 = vmatprep.subr.mxu0 0.0
    %186 = vmatpush1.msra.mxu0 0.0
    %187 = vmatprep.subr.mxu0 0.0
    %188 = vmatpush1.msra.mxu0 0.0
    %189 = vmatprep.subr.mxu0 0.0
    %190 = vmatpush1.msra.mxu0 0.0
    %191 = vmatprep.subr.mxu0 0.0
    %192 = vmatpush1.msra.mxu0 0.0
    %193 = vmatprep.subr.mxu0 0.0
    %194 = vmatpush1.msra.mxu0 0.0
    %195 = vmatprep.subr.mxu0 0.0
    %196 = vmatpush1.msra.mxu0 0.0
    %197 = vmatprep.mubr.f32.mxu0 0.0
    %198 = vmatmul.mubr.f32.gmra.mrb[0].mxu0 %v131
    %v199 = vpop.f32.mrb[0].mxu0
    %v200 = vadd.f32 0.0, %v199
    %v201 = vpop.f32.mrb[0].mxu0
    %202 = vdwg.mxu0
    %v203 = vrcp.pop 98.0
    %v204 = vmul.f32 %v127, %v203
    %v205 = vmul.f32 %v200, %v203
    %v206 = vmul.f32 %v204, %v204
    %v207 = vsub.f32 %v205, %v206
    %v208 = vmax.f32 %v207, 0.0
    %v209 = vld [vmem:[#allocation2] sm:$0x1]
    %v210 = vadd.f32 %v208, 1e-05
    %v211 = vrsqrt.pop %v210
    %v212 = vmul.f32 %v209, %v211
    %v213 = vld [vmem:[#allocation2 + $0x8] sm:$0x1]
    %v214 = vmul.f32 %v204, %v212
    %v215 = vsub.f32 %v213, %v214
    %v216 = vld [vmem:[#allocation2 + $0x28] sm:$0x7]
    %vm217 = vcmask 23552
    %v219 = vsel %vm217, %v212, 0
    %vm221 = vcmask 1042432
    %v223 = vsel %vm221, %v216, 0
    %225 = vmatprep.subr.mxu0 0.0
    %226 = vmatpush1.msra.mxu0 %v223
    %227 = vmatprep.subr.mxu0 0.0
    %228 = vmatpush1.msra.mxu0 0.0
    %229 = vmatprep.subr.mxu0 0.0
    %230 = vmatpush1.msra.mxu0 0.0
    %231 = vmatprep.subr.mxu0 0.0
    %232 = vmatpush1.msra.mxu0 0.0
    %233 = vmatprep.subr.mxu0 0.0
    %234 = vmatpush1.msra.mxu0 0.0
    %235 = vmatprep.subr.mxu0 0.0
    %236 = vmatpush1.msra.mxu0 0.0
    %237 = vmatprep.subr.mxu0 0.0
    %238 = vmatpush1.msra.mxu0 0.0
    %239 = vmatprep.subr.mxu0 0.0
    %240 = vmatpush1.msra.mxu0 0.0
    %241 = vmatprep.subr.mxu0 0.0
    %242 = vmatpush1.msra.mxu0 0.0
    %243 = vmatprep.subr.mxu0 0.0
    %244 = vmatpush1.msra.mxu0 0.0
    %245 = vmatprep.subr.mxu0 0.0
    %246 = vmatpush1.msra.mxu0 0.0
    %247 = vmatprep.subr.mxu0 0.0
    %248 = vmatpush1.msra.mxu0 0.0
    %249 = vmatprep.subr.mxu0 0.0
    %250 = vmatpush1.msra.mxu0 0.0
    %251 = vmatprep.subr.mxu0 0.0
    %252 = vmatpush1.msra.mxu0 0.0
    %253 = vmatprep.subr.mxu0 0.0
    %254 = vmatpush1.msra.mxu0 0.0
    %255 = vmatprep.subr.mxu0 0.0
    %256 = vmatpush1.msra.mxu0 0.0
    %257 = vmatprep.subr.mxu0 0.0
    %258 = vmatpush1.msra.mxu0 0.0
    %259 = vmatprep.subr.mxu0 0.0
    %260 = vmatpush1.msra.mxu0 0.0
    %261 = vmatprep.subr.mxu0 0.0
    %262 = vmatpush1.msra.mxu0 0.0
    %263 = vmatprep.subr.mxu0 0.0
    %264 = vmatpush1.msra.mxu0 0.0
    %265 = vmatprep.subr.mxu0 0.0
    %266 = vmatpush1.msra.mxu0 0.0
    %267 = vmatprep.subr.mxu0 0.0
    %268 = vmatpush1.msra.mxu0 0.0
    %269 = vmatprep.subr.mxu0 0.0
    %270 = vmatpush1.msra.mxu0 0.0
    %271 = vmatprep.subr.mxu0 0.0
    %272 = vmatpush1.msra.mxu0 0.0
    %273 = vmatprep.subr.mxu0 0.0
    %274 = vmatpush1.msra.mxu0 0.0
    %275 = vmatprep.subr.mxu0 0.0
    %276 = vmatpush1.msra.mxu0 0.0
    %277 = vmatprep.subr.mxu0 0.0
    %278 = vmatpush1.msra.mxu0 0.0
    %279 = vmatprep.subr.mxu0 0.0
    %280 = vmatpush1.msra.mxu0 0.0
    %281 = vmatprep.subr.mxu0 0.0
    %282 = vmatpush1.msra.mxu0 0.0
    %283 = vmatprep.subr.mxu0 0.0
    %284 = vmatpush1.msra.mxu0 0.0
    %285 = vmatprep.subr.mxu0 0.0
    %286 = vmatpush1.msra.mxu0 0.0
    %287 = vmatprep.subr.mxu0 0.0
    %288 = vmatpush1.msra.mxu0 0.0
    %289 = vmatprep.mubr.f32.mxu0 0.0
    %290 = vmatmul.mubr.f32.gmra.mrb[0].mxu0 %v219
    %v291 = vpop.f32.mrb[0].mxu0
    %v292 = vadd.f32 0.0, %v291
    %v293 = vpop.f32.mrb[0].mxu0
    %294 = vdwg.mxu0
    %v295 = vlaneseq
    %v296 = vshrl.u32 %v295, 7
    %v297 = vsub.s32 0, %v296
    %v298 = vrot.slane %v292, %v297
    %v299 = vmul.f32 %v26, %v298
    %v300 = vmul.f32 %v27, %v298
    %v301 = vld [vmem:[#allocation2 + $0x38] sm:$0x1]
    %v302 = vld [vmem:[#allocation2 + $0x30] sm:$0x7]
    %v304 = vsel %vm217, %v215, 0
    %v307 = vsel %vm221, %v302, 0
    %309 = vmatprep.subr.mxu0 0.0
    %310 = vmatpush1.msra.mxu0 %v307
    %311 = vmatprep.subr.mxu0 0.0
    %312 = vmatpush1.msra.mxu0 0.0
    %313 = vmatprep.subr.mxu0 0.0
    %314 = vmatpush1.msra.mxu0 0.0
    %315 = vmatprep.subr.mxu0 0.0
    %316 = vmatpush1.msra.mxu0 0.0
    %317 = vmatprep.subr.mxu0 0.0
    %318 = vmatpush1.msra.mxu0 0.0
    %319 = vmatprep.subr.mxu0 0.0
    %320 = vmatpush1.msra.mxu0 0.0
    %321 = vmatprep.subr.mxu0 0.0
    %322 = vmatpush1.msra.mxu0 0.0
    %323 = vmatprep.subr.mxu0 0.0
    %324 = vmatpush1.msra.mxu0 0.0
    %325 = vmatprep.subr.mxu0 0.0
    %326 = vmatpush1.msra.mxu0 0.0
    %327 = vmatprep.subr.mxu0 0.0
    %328 = vmatpush1.msra.mxu0 0.0
    %329 = vmatprep.subr.mxu0 0.0
    %330 = vmatpush1.msra.mxu0 0.0
    %331 = vmatprep.subr.mxu0 0.0
    %332 = vmatpush1.msra.mxu0 0.0
    %333 = vmatprep.subr.mxu0 0.0
    %334 = vmatpush1.msra.mxu0 0.0
    %335 = vmatprep.subr.mxu0 0.0
    %336 = vmatpush1.msra.mxu0 0.0
    %337 = vmatprep.subr.mxu0 0.0
    %338 = vmatpush1.msra.mxu0 0.0
    %339 = vmatprep.subr.mxu0 0.0
    %340 = vmatpush1.msra.mxu0 0.0
    %341 = vmatprep.subr.mxu0 0.0
    %342 = vmatpush1.msra.mxu0 0.0
    %343 = vmatprep.subr.mxu0 0.0
    %344 = vmatpush1.msra.mxu0 0.0
    %345 = vmatprep.subr.mxu0 0.0
    %346 = vmatpush1.msra.mxu0 0.0
    %347 = vmatprep.subr.mxu0 0.0
    %348 = vmatpush1.msra.mxu0 0.0
    %349 = vmatprep.subr.mxu0 0.0
    %350 = vmatpush1.msra.mxu0 0.0
    %351 = vmatprep.subr.mxu0 0.0
    %352 = vmatpush1.msra.mxu0 0.0
    %353 = vmatprep.subr.mxu0 0.0
    %354 = vmatpush1.msra.mxu0 0.0
    %355 = vmatprep.subr.mxu0 0.0
    %356 = vmatpush1.msra.mxu0 0.0
    %357 = vmatprep.subr.mxu0 0.0
    %358 = vmatpush1.msra.mxu0 0.0
    %359 = vmatprep.subr.mxu0 0.0
    %360 = vmatpush1.msra.mxu0 0.0
    %361 = vmatprep.subr.mxu0 0.0
    %362 = vmatpush1.msra.mxu0 0.0
    %363 = vmatprep.subr.mxu0 0.0
    %364 = vmatpush1.msra.mxu0 0.0
    %365 = vmatprep.subr.mxu0 0.0
    %366 = vmatpush1.msra.mxu0 0.0
    %367 = vmatprep.subr.mxu0 0.0
    %368 = vmatpush1.msra.mxu0 0.0
    %369 = vmatprep.subr.mxu0 0.0
    %370 = vmatpush1.msra.mxu0 0.0
    %371 = vmatprep.subr.mxu0 0.0
    %372 = vmatpush1.msra.mxu0 0.0
    %373 = vmatprep.mubr.f32.mxu0 0.0
    %374 = vmatmul.mubr.f32.gmra.mrb[0].mxu0 %v304
    %v375 = vpop.f32.mrb[0].mxu0
    %v376 = vadd.f32 0.0, %v375
    %v377 = vpop.f32.mrb[0].mxu0
    %378 = vdwg.mxu0
    %v379 = vadd.f32 %v301, %v376
    %v380 = vld [vmem:[#allocation2 + $0x40] sm:$0xff]
    %v381 = vld [vmem:[#allocation2 + $0x48] sm:$0xff]
    %v382 = vld [vmem:[#allocation2 + $0x50] sm:$0x1f]
    %v383 = vld [vmem:[#allocation2 + $0x58] sm:$0xff]
    %v384 = vld [vmem:[#allocation2 + $0x60] sm:$0xff]
    %v385 = vld [vmem:[#allocation2 + $0x68] sm:$0x1f]
    %vm388 = vcmask 1045504
    %v389 = vrot.slane %v299, 2
    %v390 = vrot.slane %v300, 2
    %v391 = vsel %vm388, %v389, %v390
    %v392 = vsel %vm28, %v391, 0
    %v394 = vsel %vm28, %v390, 0
    %v397 = vsel %vm56, %v385, 0
    %399 = vmatprep.subr.mxu0 0.0
    %400 = vmatpush1.msra.mxu0 %v383
    %401 = vmatprep.subr.mxu0 0.0
    %402 = vmatpush1.msra.mxu0 %v384
    %403 = vmatprep.subr.mxu0 0.0
    %404 = vmatpush1.msra.mxu0 %v397
    %405 = vmatprep.subr.mxu0 0.0
    %406 = vmatpush1.msra.mxu0 0.0
    %407 = vmatprep.subr.mxu0 0.0
    %408 = vmatpush1.msra.mxu0 0.0
    %409 = vmatprep.subr.mxu0 0.0
    %410 = vmatpush1.msra.mxu0 0.0
    %411 = vmatprep.subr.mxu0 0.0
    %412 = vmatpush1.msra.mxu0 0.0
    %413 = vmatprep.subr.mxu0 0.0
    %414 = vmatpush1.msra.mxu0 0.0
    %415 = vmatprep.subr.mxu0 0.0
    %416 = vmatpush1.msra.mxu0 0.0
    %417 = vmatprep.subr.mxu0 0.0
    %418 = vmatpush1.msra.mxu0 0.0
    %419 = vmatprep.subr.mxu0 0.0
    %420 = vmatpush1.msra.mxu0 0.0
    %421 = vmatprep.subr.mxu0 0.0
    %422 = vmatpush1.msra.mxu0 0.0
    %423 = vmatprep.subr.mxu0 0.0
    %424 = vmatpush1.msra.mxu0 0.0
    %425 = vmatprep.subr.mxu0 0.0
    %426 = vmatpush1.msra.mxu0 0.0
    %427 = vmatprep.subr.mxu0 0.0
    %428 = vmatpush1.msra.mxu0 0.0
    %429 = vmatprep.subr.mxu0 0.0
    %430 = vmatpush1.msra.mxu0 0.0
    %431 = vmatprep.subr.mxu0 0.0
    %432 = vmatpush1.msra.mxu0 0.0
    %433 = vmatprep.subr.mxu0 0.0
    %434 = vmatpush1.msra.mxu0 0.0
    %435 = vmatprep.subr.mxu0 0.0
    %436 = vmatpush1.msra.mxu0 0.0
    %437 = vmatprep.subr.mxu0 0.0
    %438 = vmatpush1.msra.mxu0 0.0
    %439 = vmatprep.subr.mxu0 0.0
    %440 = vmatpush1.msra.mxu0 0.0
    %441 = vmatprep.subr.mxu0 0.0
    %442 = vmatpush1.msra.mxu0 0.0
    %443 = vmatprep.subr.mxu0 0.0
    %444 = vmatpush1.msra.mxu0 0.0
    %445 = vmatprep.subr.mxu0 0.0
    %446 = vmatpush1.msra.mxu0 0.0
    %447 = vmatprep.subr.mxu0 0.0
    %448 = vmatpush1.msra.mxu0 0.0
    %449 = vmatprep.subr.mxu0 0.0
    %450 = vmatpush1.msra.mxu0 0.0
    %451 = vmatprep.subr.mxu0 0.0
    %452 = vmatpush1.msra.mxu0 0.0
    %453 = vmatprep.subr.mxu0 0.0
    %454 = vmatpush1.msra.mxu0 0.0
    %455 = vmatprep.subr.mxu0 0.0
    %456 = vmatpush1.msra.mxu0 0.0
    %457 = vmatprep.subr.mxu0 0.0
    %458 = vmatpush1.msra.mxu0 0.0
    %459 = vmatprep.subr.mxu0 0.0
    %460 = vmatpush1.msra.mxu0 0.0
    %461 = vmatprep.subr.mxu0 0.0
    %462 = vmatpush1.msra.mxu0 0.0
    %463 = vmatprep.mubr.f32.mxu0 0.0
    %464 = vmatmul.mubr.f32.gmra.mrb[0].mxu0 %v392
    %v465 = vpop.f32.mrb[0].mxu0
    %v466 = vadd.f32 0.0, %v465
    %v467 = vpop.f32.mrb[0].mxu0
    %468 = vmatprep.mubr.f32.mxu0 0.0
    %469 = vmatmul.mubr.f32.gmra.mrb[0].mxu0 %v394
    %v470 = vpop.f32.mrb[0].mxu0
    %v471 = vadd.f32 0.0, %v470
    %v472 = vpop.f32.mrb[0].mxu0
    %473 = vdwg.mxu0
    %v474 = vsel %vm28, %v299, 0
    %v476 = vsel %vm28, %v300, 0
    %v479 = vsel %vm56, %v382, 0
    %481 = vmatprep.subr.mxu0 0.0
    %482 = vmatpush1.msra.mxu0 %v380
    %483 = vmatprep.subr.mxu0 0.0
    %484 = vmatpush1.msra.mxu0 %v381
    %485 = vmatprep.subr.mxu0 0.0
    %486 = vmatpush1.msra.mxu0 %v479
    %487 = vmatprep.subr.mxu0 0.0
    %488 = vmatpush1.msra.mxu0 0.0
    %489 = vmatprep.subr.mxu0 0.0
    %490 = vmatpush1.msra.mxu0 0.0
    %491 = vmatprep.subr.mxu0 0.0
    %492 = vmatpush1.msra.mxu0 0.0
    %493 = vmatprep.subr.mxu0 0.0
    %494 = vmatpush1.msra.mxu0 0.0
    %495 = vmatprep.subr.mxu0 0.0
    %496 = vmatpush1.msra.mxu0 0.0
    %497 = vmatprep.subr.mxu0 0.0
    %498 = vmatpush1.msra.mxu0 0.0
    %499 = vmatprep.subr.mxu0 0.0
    %500 = vmatpush1.msra.mxu0 0.0
    %501 = vmatprep.subr.mxu0 0.0
    %502 = vmatpush1.msra.mxu0 0.0
    %503 = vmatprep.subr.mxu0 0.0
    %504 = vmatpush1.msra.mxu0 0.0
    %505 = vmatprep.subr.mxu0 0.0
    %506 = vmatpush1.msra.mxu0 0.0
    %507 = vmatprep.subr.mxu0 0.0
    %508 = vmatpush1.msra.mxu0 0.0
    %509 = vmatprep.subr.mxu0 0.0
    %510 = vmatpush1.msra.mxu0 0.0
    %511 = vmatprep.subr.mxu0 0.0
    %512 = vmatpush1.msra.mxu0 0.0
    %513 = vmatprep.subr.mxu0 0.0
    %514 = vmatpush1.msra.mxu0 0.0
    %515 = vmatprep.subr.mxu0 0.0
    %516 = vmatpush1.msra.mxu0 0.0
    %517 = vmatprep.subr.mxu0 0.0
    %518 = vmatpush1.msra.mxu0 0.0
    %519 = vmatprep.subr.mxu0 0.0
    %520 = vmatpush1.msra.mxu0 0.0
    %521 = vmatprep.subr.mxu0 0.0
    %522 = vmatpush1.msra.mxu0 0.0
    %523 = vmatprep.subr.mxu0 0.0
    %524 = vmatpush1.msra.mxu0 0.0
    %525 = vmatprep.subr.mxu0 0.0
    %526 = vmatpush1.msra.mxu0 0.0
    %527 = vmatprep.subr.mxu0 0.0
    %528 = vmatpush1.msra.mxu0 0.0
    %529 = vmatprep.subr.mxu0 0.0
    %530 = vmatpush1.msra.mxu0 0.0
    %531 = vmatprep.subr.mxu0 0.0
    %532 = vmatpush1.msra.mxu0 0.0
    %533 = vmatprep.subr.mxu0 0.0
    %534 = vmatpush1.msra.mxu0 0.0
    %535 = vmatprep.subr.mxu0 0.0
    %536 = vmatpush1.msra.mxu0 0.0
    %537 = vmatprep.subr.mxu0 0.0
    %538 = vmatpush1.msra.mxu0 0.0
    %539 = vmatprep.subr.mxu0 0.0
    %540 = vmatpush1.msra.mxu0 0.0
    %541 = vmatprep.subr.mxu0 0.0
    %542 = vmatpush1.msra.mxu0 0.0
    %543 = vmatprep.subr.mxu0 0.0
    %544 = vmatpush1.msra.mxu0 0.0
    %545 = vmatprep.mubr.f32.mxu0 0.0
    %546 = vmatmul.mubr.f32.gmra.mrb[0].mxu0 %v474
    %v547 = vpop.f32.mrb[0].mxu0
    %v548 = vadd.f32 %v466, %v547
    %v549 = vpop.f32.mrb[0].mxu0
    %550 = vmatprep.mubr.f32.mxu0 0.0
    %551 = vmatmul.mubr.f32.gmra.mrb[0].mxu0 %v476
    %v552 = vpop.f32.mrb[0].mxu0
    %v553 = vadd.f32 %v471, %v552
    %v554 = vpop.f32.mrb[0].mxu0
    %555 = vdwg.mxu0
    %v556 = vlaneseq
    %v557 = vshrl.u32 %v556, 7
    %v558 = vsub.s32 0, %v557
    %v559 = vrot.slane %v379, %v558
    %v560 = vadd.f32 %v548, %v559
    %v561 = vadd.f32 %v553, %v559
    %v562 = vmax.f32 %v560, 0.0
    %v563 = vmax.f32 %v561, 0.0
    %v565 = vrot.slane %v562, 2
    %v567 = vmax.f32 %v562, %v565
    %v569 = vrot.slane %v563, 2
    %v571 = vmax.f32 %v563, %v569
    %v573 = vrot.slane %v567, 2
    %v576 = vrot.slane %v571, 4
    %vm578 = vcmask 1041408
    %v579 = vsel %vm578, %v567, %v573
    %vm580 = vcmask 1043456
    %v581 = vsel %vm580, %v579, %v576
    %v582 = vld [vmem:[#allocation2 + $0x70] sm:$0xff]
    %v583 = vld [vmem:[#allocation2 + $0x78] sm:$0xff]
    %v584 = vld [vmem:[#allocation2 + $0x80] sm:$0xff]
    %v585 = vld [vmem:[#allocation2 + $0x88] sm:$0xff]
    %v586 = vld [vmem:[#allocation2 + $0x90] sm:$0xff]
    %v587 = vld [vmem:[#allocation2 + $0x98] sm:$0xff]
    %v588 = vld [vmem:[#allocation2 + $0xa0] sm:$0xff]
    %v589 = vld [vmem:[#allocation2 + $0xa8] sm:$0xff]
    %v590 = vld [vmem:[#allocation2 + $0xb0] sm:$0xff]
    %v591 = vld [vmem:[#allocation2 + $0xb8] sm:$0xff]
    %v592 = vld [vmem:[#allocation2 + $0xc0] sm:$0xff]
    %v593 = vld [vmem:[#allocation2 + $0xc8] sm:$0xff]
    %vm594 = vcmask 785408
    %v596 = vsel %vm594, %v581, 0
    %598 = vmatprep.subr.mxu0 0.0
    %599 = vmatpush1.msra.mxu0 %v582
    %600 = vmatprep.subr.mxu0 0.0
    %601 = vmatpush1.msra.mxu0 %v583
    %602 = vmatprep.subr.mxu0 0.0
    %603 = vmatpush1.msra.mxu0 %v584
    %604 = vmatprep.subr.mxu0 0.0
    %605 = vmatpush1.msra.mxu0 %v585
    %606 = vmatprep.subr.mxu0 0.0
    %607 = vmatpush1.msra.mxu0 %v586
    %608 = vmatprep.subr.mxu0 0.0
    %609 = vmatpush1.msra.mxu0 %v587
    %610 = vmatprep.subr.mxu0 0.0
    %611 = vmatpush1.msra.mxu0 %v588
    %612 = vmatprep.subr.mxu0 0.0
    %613 = vmatpush1.msra.mxu0 %v589
    %614 = vmatprep.subr.mxu0 0.0
    %615 = vmatpush1.msra.mxu0 %v590
    %616 = vmatprep.subr.mxu0 0.0
    %617 = vmatpush1.msra.mxu0 %v591
    %618 = vmatprep.subr.mxu0 0.0
    %619 = vmatpush1.msra.mxu0 %v592
    %620 = vmatprep.subr.mxu0 0.0
    %621 = vmatpush1.msra.mxu0 %v593
    %622 = vmatprep.subr.mxu0 0.0
    %623 = vmatpush1.msra.mxu0 0.0
    %624 = vmatprep.subr.mxu0 0.0
    %625 = vmatpush1.msra.mxu0 0.0
    %626 = vmatprep.subr.mxu0 0.0
    %627 = vmatpush1.msra.mxu0 0.0
    %628 = vmatprep.subr.mxu0 0.0
    %629 = vmatpush1.msra.mxu0 0.0
    %630 = vmatprep.subr.mxu0 0.0
    %631 = vmatpush1.msra.mxu0 0.0
    %632 = vmatprep.subr.mxu0 0.0
    %633 = vmatpush1.msra.mxu0 0.0
    %634 = vmatprep.subr.mxu0 0.0
    %635 = vmatpush1.msra.mxu0 0.0
    %636 = vmatprep.subr.mxu0 0.0
    %637 = vmatpush1.msra.mxu0 0.0
    %638 = vmatprep.subr.mxu0 0.0
    %639 = vmatpush1.msra.mxu0 0.0
    %640 = vmatprep.subr.mxu0 0.0
    %641 = vmatpush1.msra.mxu0 0.0
    %642 = vmatprep.subr.mxu0 0.0
    %643 = vmatpush1.msra.mxu0 0.0
    %644 = vmatprep.subr.mxu0 0.0
    %645 = vmatpush1.msra.mxu0 0.0
    %646 = vmatprep.subr.mxu0 0.0
    %647 = vmatpush1.msra.mxu0 0.0
    %648 = vmatprep.subr.mxu0 0.0
    %649 = vmatpush1.msra.mxu0 0.0
    %650 = vmatprep.subr.mxu0 0.0
    %651 = vmatpush1.msra.mxu0 0.0
    %652 = vmatprep.subr.mxu0 0.0
    %653 = vmatpush1.msra.mxu0 0.0
    %654 = vmatprep.subr.mxu0 0.0
    %655 = vmatpush1.msra.mxu0 0.0
    %656 = vmatprep.subr.mxu0 0.0
    %657 = vmatpush1.msra.mxu0 0.0
    %658 = vmatprep.subr.mxu0 0.0
    %659 = vmatpush1.msra.mxu0 0.0
    %660 = vmatprep.subr.mxu0 0.0
    %661 = vmatpush1.msra.mxu0 0.0
    %662 = vmatprep.mubr.f32.mxu0 0.0
    %663 = vmatmul.mubr.f32.gmra.mrb[0].mxu0 %v596
    %v664 = vpop.f32.mrb[0].mxu0
    %v665 = vadd.f32 0.0, %v664
    %v666 = vpop.f32.mrb[0].mxu0
    %667 = vdwg.mxu0
    %v668 = vld [vmem:[#allocation2 + $0xd0] sm:$0xff]
    %v669 = vld [vmem:[#allocation2 + $0xd8] sm:$0xff]
    %v670 = vld [vmem:[#allocation2 + $0xe0] sm:$0xff]
    %v671 = vld [vmem:[#allocation2 + $0xe8] sm:$0xff]
    %v672 = vld [vmem:[#allocation2 + $0xf0] sm:$0xff]
    %v673 = vld [vmem:[#allocation2 + $0xf8] sm:$0xff]
    %v674 = vld [vmem:[#allocation2 + $0x100] sm:$0xff]
    %v675 = vld [vmem:[#allocation2 + $0x108] sm:$0xff]
    %v676 = vld [vmem:[#allocation2 + $0x110] sm:$0xff]
    %v677 = vld [vmem:[#allocation2 + $0x118] sm:$0xff]
    %v678 = vld [vmem:[#allocation2 + $0x120] sm:$0xff]
    %v679 = vld [vmem:[#allocation2 + $0x128] sm:$0xff]
    %680 = vmatprep.subr.mxu0 0.0
    %681 = vmatpush1.msra.mxu0 %v668
    %682 = vmatprep.subr.mxu0 0.0
    %683 = vmatpush1.msra.mxu0 %v669
    %684 = vmatprep.subr.mxu0 0.0
    %685 = vmatpush1.msra.mxu0 %v670
    %686 = vmatprep.subr.mxu0 0.0
    %687 = vmatpush1.msra.mxu0 %v671
    %688 = vmatprep.subr.mxu0 0.0
    %689 = vmatpush1.msra.mxu0 %v672
    %690 = vmatprep.subr.mxu0 0.0
    %691 = vmatpush1.msra.mxu0 %v673
    %692 = vmatprep.subr.mxu0 0.0
    %693 = vmatpush1.msra.mxu0 %v674
    %694 = vmatprep.subr.mxu0 0.0
    %695 = vmatpush1.msra.mxu0 %v675
    %696 = vmatprep.subr.mxu0 0.0
    %697 = vmatpush1.msra.mxu0 %v676
    %698 = vmatprep.subr.mxu0 0.0
    %699 = vmatpush1.msra.mxu0 %v677
    %700 = vmatprep.subr.mxu0 0.0
    %701 = vmatpush1.msra.mxu0 %v678
    %702 = vmatprep.subr.mxu0 0.0
    %703 = vmatpush1.msra.mxu0 %v679
    %704 = vmatprep.subr.mxu0 0.0
    %705 = vmatpush1.msra.mxu0 0.0
    %706 = vmatprep.subr.mxu0 0.0
    %707 = vmatpush1.msra.mxu0 0.0
    %708 = vmatprep.subr.mxu0 0.0
    %709 = vmatpush1.msra.mxu0 0.0
    %710 = vmatprep.subr.mxu0 0.0
    %711 = vmatpush1.msra.mxu0 0.0
    %712 = vmatprep.subr.mxu0 0.0
    %713 = vmatpush1.msra.mxu0 0.0
    %714 = vmatprep.subr.mxu0 0.0
    %715 = vmatpush1.msra.mxu0 0.0
    %716 = vmatprep.subr.mxu0 0.0
    %717 = vmatpush1.msra.mxu0 0.0
    %718 = vmatprep.subr.mxu0 0.0
    %719 = vmatpush1.msra.mxu0 0.0
    %720 = vmatprep.subr.mxu0 0.0
    %721 = vmatpush1.msra.mxu0 0.0
    %722 = vmatprep.subr.mxu0 0.0
    %723 = vmatpush1.msra.mxu0 0.0
    %724 = vmatprep.subr.mxu0 0.0
    %725 = vmatpush1.msra.mxu0 0.0
    %726 = vmatprep.subr.mxu0 0.0
    %727 = vmatpush1.msra.mxu0 0.0
    %728 = vmatprep.subr.mxu0 0.0
    %729 = vmatpush1.msra.mxu0 0.0
    %730 = vmatprep.subr.mxu0 0.0
    %731 = vmatpush1.msra.mxu0 0.0
    %732 = vmatprep.subr.mxu0 0.0
    %733 = vmatpush1.msra.mxu0 0.0
    %734 = vmatprep.subr.mxu0 0.0
    %735 = vmatpush1.msra.mxu0 0.0
    %736 = vmatprep.subr.mxu0 0.0
    %737 = vmatpush1.msra.mxu0 0.0
    %738 = vmatprep.subr.mxu0 0.0
    %739 = vmatpush1.msra.mxu0 0.0
    %740 = vmatprep.subr.mxu0 0.0
    %741 = vmatpush1.msra.mxu0 0.0
    %742 = vmatprep.subr.mxu0 0.0
    %743 = vmatpush1.msra.mxu0 0.0
    %744 = vmatprep.mubr.f32.mxu0 0.0
    %745 = vmatmul.mubr.f32.gmra.mrb[0].mxu0 %v596
    %v746 = vpop.f32.mrb[0].mxu0
    %v747 = vadd.f32 0.0, %v746
    %v748 = vpop.f32.mrb[0].mxu0
    %749 = vdwg.mxu0
    %v750 = vmax.f32 %v665, %v747
    %v751 = vld [vmem:[#allocation2 + $0x130] sm:$0xff]
    %v752 = vld [vmem:[#allocation2 + $0x138] sm:$0xff]
    %v753 = vld [vmem:[#allocation2 + $0x140] sm:$0xff]
    %v754 = vld [vmem:[#allocation2 + $0x148] sm:$0xff]
    %v755 = vld [vmem:[#allocation2 + $0x150] sm:$0xff]
    %v756 = vld [vmem:[#allocation2 + $0x158] sm:$0xff]
    %v757 = vld [vmem:[#allocation2 + $0x160] sm:$0xff]
    %v758 = vld [vmem:[#allocation2 + $0x168] sm:$0xff]
    %v759 = vld [vmem:[#allocation2 + $0x170] sm:$0xff]
    %v760 = vld [vmem:[#allocation2 + $0x178] sm:$0xff]
    %v761 = vld [vmem:[#allocation2 + $0x180] sm:$0xff]
    %v762 = vld [vmem:[#allocation2 + $0x188] sm:$0xff]
    %v763 = vld [vmem:[#allocation2 + $0x190] sm:$0x1]
    %v765 = vrot.slane %v750, 2
    %vm766 = vcmask 392192
    %v767 = vsel %vm766, %v765, 0
    %769 = vmatprep.subr.mxu0 0.0
    %770 = vmatpush1.msra.mxu0 %v757
    %771 = vmatprep.subr.mxu0 0.0
    %772 = vmatpush1.msra.mxu0 %v758
    %773 = vmatprep.subr.mxu0 0.0
    %774 = vmatpush1.msra.mxu0 %v759
    %775 = vmatprep.subr.mxu0 0.0
    %776 = vmatpush1.msra.mxu0 %v760
    %777 = vmatprep.subr.mxu0 0.0
    %778 = vmatpush1.msra.mxu0 %v761
    %779 = vmatprep.subr.mxu0 0.0
    %780 = vmatpush1.msra.mxu0 %v762
    %781 = vmatprep.subr.mxu0 0.0
    %782 = vmatpush1.msra.mxu0 0.0
    %783 = vmatprep.subr.mxu0 0.0
    %784 = vmatpush1.msra.mxu0 0.0
    %785 = vmatprep.subr.mxu0 0.0
    %786 = vmatpush1.msra.mxu0 0.0
    %787 = vmatprep.subr.mxu0 0.0
    %788 = vmatpush1.msra.mxu0 0.0
    %789 = vmatprep.subr.mxu0 0.0
    %790 = vmatpush1.msra.mxu0 0.0
    %791 = vmatprep.subr.mxu0 0.0
    %792 = vmatpush1.msra.mxu0 0.0
    %793 = vmatprep.subr.mxu0 0.0
    %794 = vmatpush1.msra.mxu0 0.0
    %795 = vmatprep.subr.mxu0 0.0
    %796 = vmatpush1.msra.mxu0 0.0
    %797 = vmatprep.subr.mxu0 0.0
    %798 = vmatpush1.msra.mxu0 0.0
    %799 = vmatprep.subr.mxu0 0.0
    %800 = vmatpush1.msra.mxu0 0.0
    %801 = vmatprep.subr.mxu0 0.0
    %802 = vmatpush1.msra.mxu0 0.0
    %803 = vmatprep.subr.mxu0 0.0
    %804 = vmatpush1.msra.mxu0 0.0
    %805 = vmatprep.subr.mxu0 0.0
    %806 = vmatpush1.msra.mxu0 0.0
    %807 = vmatprep.subr.mxu0 0.0
    %808 = vmatpush1.msra.mxu0 0.0
    %809 = vmatprep.subr.mxu0 0.0
    %810 = vmatpush1.msra.mxu0 0.0
    %811 = vmatprep.subr.mxu0 0.0
    %812 = vmatpush1.msra.mxu0 0.0
    %813 = vmatprep.subr.mxu0 0.0
    %814 = vmatpush1.msra.mxu0 0.0
    %815 = vmatprep.subr.mxu0 0.0
    %816 = vmatpush1.msra.mxu0 0.0
    %817 = vmatprep.subr.mxu0 0.0
    %818 = vmatpush1.msra.mxu0 0.0
    %819 = vmatprep.subr.mxu0 0.0
    %820 = vmatpush1.msra.mxu0 0.0
    %821 = vmatprep.subr.mxu0 0.0
    %822 = vmatpush1.msra.mxu0 0.0
    %823 = vmatprep.subr.mxu0 0.0
    %824 = vmatpush1.msra.mxu0 0.0
    %825 = vmatprep.subr.mxu0 0.0
    %826 = vmatpush1.msra.mxu0 0.0
    %827 = vmatprep.subr.mxu0 0.0
    %828 = vmatpush1.msra.mxu0 0.0
    %829 = vmatprep.subr.mxu0 0.0
    %830 = vmatpush1.msra.mxu0 0.0
    %831 = vmatprep.subr.mxu0 0.0
    %832 = vmatpush1.msra.mxu0 0.0
    %833 = vmatprep.mubr.f32.mxu0 0.0
    %834 = vmatmul.mubr.f32.gmra.mrb[0].mxu0 %v767
    %v835 = vpop.f32.mrb[0].mxu0
    %v836 = vadd.f32 0.0, %v835
    %v837 = vpop.f32.mrb[0].mxu0
    %838 = vdwg.mxu0
    %v839 = vsel %vm766, %v750, 0
    %841 = vmatprep.subr.mxu0 0.0
    %842 = vmatpush1.msra.mxu0 %v751
    %843 = vmatprep.subr.mxu0 0.0
    %844 = vmatpush1.msra.mxu0 %v752
    %845 = vmatprep.subr.mxu0 0.0
    %846 = vmatpush1.msra.mxu0 %v753
    %847 = vmatprep.subr.mxu0 0.0
    %848 = vmatpush1.msra.mxu0 %v754
    %849 = vmatprep.subr.mxu0 0.0
    %850 = vmatpush1.msra.mxu0 %v755
    %851 = vmatprep.subr.mxu0 0.0
    %852 = vmatpush1.msra.mxu0 %v756
    %853 = vmatprep.subr.mxu0 0.0
    %854 = vmatpush1.msra.mxu0 0.0
    %855 = vmatprep.subr.mxu0 0.0
    %856 = vmatpush1.msra.mxu0 0.0
    %857 = vmatprep.subr.mxu0 0.0
    %858 = vmatpush1.msra.mxu0 0.0
    %859 = vmatprep.subr.mxu0 0.0
    %860 = vmatpush1.msra.mxu0 0.0
    %861 = vmatprep.subr.mxu0 0.0
    %862 = vmatpush1.msra.mxu0 0.0
    %863 = vmatprep.subr.mxu0 0.0
    %864 = vmatpush1.msra.mxu0 0.0
    %865 = vmatprep.subr.mxu0 0.0
    %866 = vmatpush1.msra.mxu0 0.0
    %867 = vmatprep.subr.mxu0 0.0
    %868 = vmatpush1.msra.mxu0 0.0
    %869 = vmatprep.subr.mxu0 0.0
    %870 = vmatpush1.msra.mxu0 0.0
    %871 = vmatprep.subr.mxu0 0.0
    %872 = vmatpush1.msra.mxu0 0.0
    %873 = vmatprep.subr.mxu0 0.0
    %874 = vmatpush1.msra.mxu0 0.0
    %875 = vmatprep.subr.mxu0 0.0
    %876 = vmatpush1.msra.mxu0 0.0
    %877 = vmatprep.subr.mxu0 0.0
    %878 = vmatpush1.msra.mxu0 0.0
    %879 = vmatprep.subr.mxu0 0.0
    %880 = vmatpush1.msra.mxu0 0.0
    %881 = vmatprep.subr.mxu0 0.0
    %882 = vmatpush1.msra.mxu0 0.0
    %883 = vmatprep.subr.mxu0 0.0
    %884 = vmatpush1.msra.mxu0 0.0
    %885 = vmatprep.subr.mxu0 0.0
    %886 = vmatpush1.msra.mxu0 0.0
    %887 = vmatprep.subr.mxu0 0.0
    %888 = vmatpush1.msra.mxu0 0.0
    %889 = vmatprep.subr.mxu0 0.0
    %890 = vmatpush1.msra.mxu0 0.0
    %891 = vmatprep.subr.mxu0 0.0
    %892 = vmatpush1.msra.mxu0 0.0
    %893 = vmatprep.subr.mxu0 0.0
    %894 = vmatpush1.msra.mxu0 0.0
    %895 = vmatprep.subr.mxu0 0.0
    %896 = vmatpush1.msra.mxu0 0.0
    %897 = vmatprep.subr.mxu0 0.0
    %898 = vmatpush1.msra.mxu0 0.0
    %899 = vmatprep.subr.mxu0 0.0
    %900 = vmatpush1.msra.mxu0 0.0
    %901 = vmatprep.subr.mxu0 0.0
    %902 = vmatpush1.msra.mxu0 0.0
    %903 = vmatprep.subr.mxu0 0.0
    %904 = vmatpush1.msra.mxu0 0.0
    %905 = vmatprep.mubr.f32.mxu0 0.0
    %906 = vmatmul.mubr.f32.gmra.mrb[0].mxu0 %v839
    %v907 = vpop.f32.mrb[0].mxu0
    %v908 = vadd.f32 %v836, %v907
    %v909 = vpop.f32.mrb[0].mxu0
    %910 = vdwg.mxu0
    %v911 = vlaneseq
    %v912 = vshrl.u32 %v911, 7
    %v913 = vsub.s32 0, %v912
    %v914 = vrot.slane %v763, %v913
    %v915 = vadd.f32 %v908, %v914
    %v916 = vmax.f32 %v915, 0.0
    %v917 = vld [vmem:[#allocation2 + $0x198] sm:$0xff]
    %v918 = vld [vmem:[#allocation2 + $0x1a0] sm:$0xff]
    %v919 = vld [vmem:[#allocation2 + $0x1a8] sm:$0xff]
    %v920 = vld [vmem:[#allocation2 + $0x1b0] sm:$0xff]
    %v921 = vld [vmem:[#allocation2 + $0x1b8] sm:$0xff]
    %v922 = vld [vmem:[#allocation2 + $0x1c0] sm:$0xff]
    %v923 = vld [vmem:[#allocation2 + $0x1c8] sm:$0xff]
    %v924 = vld [vmem:[#allocation2 + $0x1d0] sm:$0xff]
    %v925 = vld [vmem:[#allocation2 + $0x1d8] sm:$0xff]
    %v926 = vld [vmem:[#allocation2 + $0x1e0] sm:$0xff]
    %v927 = vld [vmem:[#allocation2 + $0x1e8] sm:$0xff]
    %v928 = vld [vmem:[#allocation2 + $0x1f0] sm:$0xff]
    %v929 = vld [vmem:[#allocation2 + $0x1f8] sm:$0xff]
    %v930 = vld [vmem:[#allocation2 + $0x200] sm:$0xff]
    %v931 = vld [vmem:[#allocation2 + $0x208] sm:$0xff]
    %v932 = vld [vmem:[#allocation2 + $0x210] sm:$0xff]
    %v933 = vld [vmem:[#allocation2 + $0x218] sm:$0x1]
    %v935 = vrot.slane %v916, 2
    %vm936 = vcmask 523264
    %v937 = vsel %vm936, %v935, 0
    %939 = vmatprep.subr.mxu0 0.0
    %940 = vmatpush1.msra.mxu0 %v925
    %941 = vmatprep.subr.mxu0 0.0
    %942 = vmatpush1.msra.mxu0 %v926
    %943 = vmatprep.subr.mxu0 0.0
    %944 = vmatpush1.msra.mxu0 %v927
    %945 = vmatprep.subr.mxu0 0.0
    %946 = vmatpush1.msra.mxu0 %v928
    %947 = vmatprep.subr.mxu0 0.0
    %948 = vmatpush1.msra.mxu0 %v929
    %949 = vmatprep.subr.mxu0 0.0
    %950 = vmatpush1.msra.mxu0 %v930
    %951 = vmatprep.subr.mxu0 0.0
    %952 = vmatpush1.msra.mxu0 %v931
    %953 = vmatprep.subr.mxu0 0.0
    %954 = vmatpush1.msra.mxu0 %v932
    %955 = vmatprep.subr.mxu0 0.0
    %956 = vmatpush1.msra.mxu0 0.0
    %957 = vmatprep.subr.mxu0 0.0
    %958 = vmatpush1.msra.mxu0 0.0
    %959 = vmatprep.subr.mxu0 0.0
    %960 = vmatpush1.msra.mxu0 0.0
    %961 = vmatprep.subr.mxu0 0.0
    %962 = vmatpush1.msra.mxu0 0.0
    %963 = vmatprep.subr.mxu0 0.0
    %964 = vmatpush1.msra.mxu0 0.0
    %965 = vmatprep.subr.mxu0 0.0
    %966 = vmatpush1.msra.mxu0 0.0
    %967 = vmatprep.subr.mxu0 0.0
    %968 = vmatpush1.msra.mxu0 0.0
    %969 = vmatprep.subr.mxu0 0.0
    %970 = vmatpush1.msra.mxu0 0.0
    %971 = vmatprep.subr.mxu0 0.0
    %972 = vmatpush1.msra.mxu0 0.0
    %973 = vmatprep.subr.mxu0 0.0
    %974 = vmatpush1.msra.mxu0 0.0
    %975 = vmatprep.subr.mxu0 0.0
    %976 = vmatpush1.msra.mxu0 0.0
    %977 = vmatprep.subr.mxu0 0.0
    %978 = vmatpush1.msra.mxu0 0.0
    %979 = vmatprep.subr.mxu0 0.0
    %980 = vmatpush1.msra.mxu0 0.0
    %981 = vmatprep.subr.mxu0 0.0
    %982 = vmatpush1.msra.mxu0 0.0
    %983 = vmatprep.subr.mxu0 0.0
    %984 = vmatpush1.msra.mxu0 0.0
    %985 = vmatprep.subr.mxu0 0.0
    %986 = vmatpush1.msra.mxu0 0.0
    %987 = vmatprep.subr.mxu0 0.0
    %988 = vmatpush1.msra.mxu0 0.0
    %989 = vmatprep.subr.mxu0 0.0
    %990 = vmatpush1.msra.mxu0 0.0
    %991 = vmatprep.subr.mxu0 0.0
    %992 = vmatpush1.msra.mxu0 0.0
    %993 = vmatprep.subr.mxu0 0.0
    %994 = vmatpush1.msra.mxu0 0.0
    %995 = vmatprep.subr.mxu0 0.0
    %996 = vmatpush1.msra.mxu0 0.0
    %997 = vmatprep.subr.mxu0 0.0
    %998 = vmatpush1.msra.mxu0 0.0
    %999 = vmatprep.subr.mxu0 0.0
    %1000 = vmatpush1.msra.mxu0 0.0
    %1001 = vmatprep.subr.mxu0 0.0
    %1002 = vmatpush1.msra.mxu0 0.0
    %1003 = vmatprep.mubr.f32.mxu0 0.0
    %1004 = vmatmul.mubr.f32.gmra.mrb[0].mxu0 %v937
    %v1005 = vpop.f32.mrb[0].mxu0
    %v1006 = vadd.f32 0.0, %v1005
    %v1007 = vpop.f32.mrb[0].mxu0
    %1008 = vdwg.mxu0
    %v1009 = vsel %vm936, %v916, 0
    %1011 = vmatprep.subr.mxu0 0.0
    %1012 = vmatpush1.msra.mxu0 %v917
    %1013 = vmatprep.subr.mxu0 0.0
    %1014 = vmatpush1.msra.mxu0 %v918
    %1015 = vmatprep.subr.mxu0 0.0
    %1016 = vmatpush1.msra.mxu0 %v919
    %1017 = vmatprep.subr.mxu0 0.0
    %1018 = vmatpush1.msra.mxu0 %v920
    %1019 = vmatprep.subr.mxu0 0.0
    %1020 = vmatpush1.msra.mxu0 %v921
    %1021 = vmatprep.subr.mxu0 0.0
    %1022 = vmatpush1.msra.mxu0 %v922
    %1023 = vmatprep.subr.mxu0 0.0
    %1024 = vmatpush1.msra.mxu0 %v923
    %1025 = vmatprep.subr.mxu0 0.0
    %1026 = vmatpush1.msra.mxu0 %v924
    %1027 = vmatprep.subr.mxu0 0.0
    %1028 = vmatpush1.msra.mxu0 0.0
    %1029 = vmatprep.subr.mxu0 0.0
    %1030 = vmatpush1.msra.mxu0 0.0
    %1031 = vmatprep.subr.mxu0 0.0
    %1032 = vmatpush1.msra.mxu0 0.0
    %1033 = vmatprep.subr.mxu0 0.0
    %1034 = vmatpush1.msra.mxu0 0.0
    %1035 = vmatprep.subr.mxu0 0.0
    %1036 = vmatpush1.msra.mxu0 0.0
    %1037 = vmatprep.subr.mxu0 0.0
    %1038 = vmatpush1.msra.mxu0 0.0
    %1039 = vmatprep.subr.mxu0 0.0
    %1040 = vmatpush1.msra.mxu0 0.0
    %1041 = vmatprep.subr.mxu0 0.0
    %1042 = vmatpush1.msra.mxu0 0.0
    %1043 = vmatprep.subr.mxu0 0.0
    %1044 = vmatpush1.msra.mxu0 0.0
    %1045 = vmatprep.subr.mxu0 0.0
    %1046 = vmatpush1.msra.mxu0 0.0
    %1047 = vmatprep.subr.mxu0 0.0
    %1048 = vmatpush1.msra.mxu0 0.0
    %1049 = vmatprep.subr.mxu0 0.0
    %1050 = vmatpush1.msra.mxu0 0.0
    %1051 = vmatprep.subr.mxu0 0.0
    %1052 = vmatpush1.msra.mxu0 0.0
    %1053 = vmatprep.subr.mxu0 0.0
    %1054 = vmatpush1.msra.mxu0 0.0
    %1055 = vmatprep.subr.mxu0 0.0
    %1056 = vmatpush1.msra.mxu0 0.0
    %1057 = vmatprep.subr.mxu0 0.0
    %1058 = vmatpush1.msra.mxu0 0.0
    %1059 = vmatprep.subr.mxu0 0.0
    %1060 = vmatpush1.msra.mxu0 0.0
    %1061 = vmatprep.subr.mxu0 0.0
    %1062 = vmatpush1.msra.mxu0 0.0
    %1063 = vmatprep.subr.mxu0 0.0
    %1064 = vmatpush1.msra.mxu0 0.0
    %1065 = vmatprep.subr.mxu0 0.0
    %1066 = vmatpush1.msra.mxu0 0.0
    %1067 = vmatprep.subr.mxu0 0.0
    %1068 = vmatpush1.msra.mxu0 0.0
    %1069 = vmatprep.subr.mxu0 0.0
    %1070 = vmatpush1.msra.mxu0 0.0
    %1071 = vmatprep.subr.mxu0 0.0
    %1072 = vmatpush1.msra.mxu0 0.0
    %1073 = vmatprep.subr.mxu0 0.0
    %1074 = vmatpush1.msra.mxu0 0.0
    %1075 = vmatprep.mubr.f32.mxu0 0.0
    %1076 = vmatmul.mubr.f32.gmra.mrb[0].mxu0 %v1009
    %v1077 = vpop.f32.mrb[0].mxu0
    %v1078 = vadd.f32 %v1006, %v1077
    %v1079 = vpop.f32.mrb[0].mxu0
    %1080 = vdwg.mxu0
    %v1081 = vlaneseq
    %v1082 = vshrl.u32 %v1081, 7
    %v1083 = vsub.s32 0, %v1082
    %v1084 = vrot.slane %v933, %v1083
    %v1085 = vadd.f32 %v1078, %v1084
    %v1086 = vmax.f32 %v1085, 0.0
    %v1087 = vld [vmem:[#allocation2 + $0x220] sm:$0xff]
    %v1088 = vld [vmem:[#allocation2 + $0x228] sm:$0xff]
    %v1089 = vld [vmem:[#allocation2 + $0x230] sm:$0xff]
    %v1090 = vld [vmem:[#allocation2 + $0x238] sm:$0xff]
    %v1091 = vld [vmem:[#allocation2 + $0x240] sm:$0xff]
    %v1092 = vld [vmem:[#allocation2 + $0x248] sm:$0xff]
    %v1093 = vld [vmem:[#allocation2 + $0x250] sm:$0xff]
    %v1094 = vld [vmem:[#allocation2 + $0x258] sm:$0xff]
    %v1095 = vld [vmem:[#allocation2 + $0x260] sm:$0x1]
    %v1096 = vlaneseq
    %v1097 = vshrl.u32 %v1096, 7
    %v1098 = vsub.s32 0, %v1097
    %v1099 = vrot.slane %v1095, %v1098
    %v1101 = vsel %vm936, %v1086, 0
    %1103 = vmatprep.subr.mxu0 0.0
    %1104 = vmatpush1.msra.mxu0 %v1087
    %1105 = vmatprep.subr.mxu0 0.0
    %1106 = vmatpush1.msra.mxu0 %v1088
    %1107 = vmatprep.subr.mxu0 0.0
    %1108 = vmatpush1.msra.mxu0 %v1089
    %1109 = vmatprep.subr.mxu0 0.0
    %1110 = vmatpush1.msra.mxu0 %v1090
    %1111 = vmatprep.subr.mxu0 0.0
    %1112 = vmatpush1.msra.mxu0 %v1091
    %1113 = vmatprep.subr.mxu0 0.0
    %1114 = vmatpush1.msra.mxu0 %v1092
    %1115 = vmatprep.subr.mxu0 0.0
    %1116 = vmatpush1.msra.mxu0 %v1093
    %1117 = vmatprep.subr.mxu0 0.0
    %1118 = vmatpush1.msra.mxu0 %v1094
    %1119 = vmatprep.subr.mxu0 0.0
    %1120 = vmatpush1.msra.mxu0 0.0
    %1121 = vmatprep.subr.mxu0 0.0
    %1122 = vmatpush1.msra.mxu0 0.0
    %1123 = vmatprep.subr.mxu0 0.0
    %1124 = vmatpush1.msra.mxu0 0.0
    %1125 = vmatprep.subr.mxu0 0.0
    %1126 = vmatpush1.msra.mxu0 0.0
    %1127 = vmatprep.subr.mxu0 0.0
    %1128 = vmatpush1.msra.mxu0 0.0
    %1129 = vmatprep.subr.mxu0 0.0
    %1130 = vmatpush1.msra.mxu0 0.0
    %1131 = vmatprep.subr.mxu0 0.0
    %1132 = vmatpush1.msra.mxu0 0.0
    %1133 = vmatprep.subr.mxu0 0.0
    %1134 = vmatpush1.msra.mxu0 0.0
    %1135 = vmatprep.subr.mxu0 0.0
    %1136 = vmatpush1.msra.mxu0 0.0
    %1137 = vmatprep.subr.mxu0 0.0
    %1138 = vmatpush1.msra.mxu0 0.0
    %1139 = vmatprep.subr.mxu0 0.0
    %1140 = vmatpush1.msra.mxu0 0.0
    %1141 = vmatprep.subr.mxu0 0.0
    %1142 = vmatpush1.msra.mxu0 0.0
    %1143 = vmatprep.subr.mxu0 0.0
    %1144 = vmatpush1.msra.mxu0 0.0
    %1145 = vmatprep.subr.mxu0 0.0
    %1146 = vmatpush1.msra.mxu0 0.0
    %1147 = vmatprep.subr.mxu0 0.0
    %1148 = vmatpush1.msra.mxu0 0.0
    %1149 = vmatprep.subr.mxu0 0.0
    %1150 = vmatpush1.msra.mxu0 0.0
    %1151 = vmatprep.subr.mxu0 0.0
    %1152 = vmatpush1.msra.mxu0 0.0
    %1153 = vmatprep.subr.mxu0 0.0
    %1154 = vmatpush1.msra.mxu0 0.0
    %1155 = vmatprep.subr.mxu0 0.0
    %1156 = vmatpush1.msra.mxu0 0.0
    %1157 = vmatprep.subr.mxu0 0.0
    %1158 = vmatpush1.msra.mxu0 0.0
    %1159 = vmatprep.subr.mxu0 0.0
    %1160 = vmatpush1.msra.mxu0 0.0
    %1161 = vmatprep.subr.mxu0 0.0
    %1162 = vmatpush1.msra.mxu0 0.0
    %1163 = vmatprep.subr.mxu0 0.0
    %1164 = vmatpush1.msra.mxu0 0.0
    %1165 = vmatprep.subr.mxu0 0.0
    %1166 = vmatpush1.msra.mxu0 0.0
    %1167 = vmatprep.mubr.f32.mxu0 0.0
    %1168 = vmatmul.mubr.f32.gmra.mrb[0].mxu0 %v1101
    %v1169 = vpop.f32.mrb[0].mxu0
    %v1170 = vadd.f32 %v1099, %v1169
    %v1171 = vpop.f32.mrb[0].mxu0
    %1172 = vdwg.mxu0
    %v1173 = vtanh.pop %v1170
    %v1174 = vld [vmem:[#allocation2 + $0x268] sm:$0xff]
    %v1175 = vld [vmem:[#allocation2 + $0x270] sm:$0xff]
    %v1176 = vld [vmem:[#allocation2 + $0x278] sm:$0xff]
    %v1177 = vld [vmem:[#allocation2 + $0x280] sm:$0xff]
    %v1178 = vld [vmem:[#allocation2 + $0x288] sm:$0xff]
    %v1179 = vld [vmem:[#allocation2 + $0x290] sm:$0xff]
    %v1180 = vld [vmem:[#allocation2 + $0x298] sm:$0xff]
    %v1181 = vld [vmem:[#allocation2 + $0x2a0] sm:$0xff]
    %v1182 = vld [vmem:[#allocation2 + $0x2a8] sm:$0x1]
    %v1183 = vlaneseq
    %v1184 = vshrl.u32 %v1183, 7
    %v1185 = vsub.s32 0, %v1184
    %v1186 = vrot.slane %v1182, %v1185
    %v1188 = vsel %vm936, %v1173, 0
    %1190 = vmatprep.subr.mxu0 0.0
    %1191 = vmatpush1.msra.mxu0 %v1174
    %1192 = vmatprep.subr.mxu0 0.0
    %1193 = vmatpush1.msra.mxu0 %v1175
    %1194 = vmatprep.subr.mxu0 0.0
    %1195 = vmatpush1.msra.mxu0 %v1176
    %1196 = vmatprep.subr.mxu0 0.0
    %1197 = vmatpush1.msra.mxu0 %v1177
    %1198 = vmatprep.subr.mxu0 0.0
    %1199 = vmatpush1.msra.mxu0 %v1178
    %1200 = vmatprep.subr.mxu0 0.0
    %1201 = vmatpush1.msra.mxu0 %v1179
    %1202 = vmatprep.subr.mxu0 0.0
    %1203 = vmatpush1.msra.mxu0 %v1180
    %1204 = vmatprep.subr.mxu0 0.0
    %1205 = vmatpush1.msra.mxu0 %v1181
    %1206 = vmatprep.subr.mxu0 0.0
    %1207 = vmatpush1.msra.mxu0 0.0
    %1208 = vmatprep.subr.mxu0 0.0
    %1209 = vmatpush1.msra.mxu0 0.0
    %1210 = vmatprep.subr.mxu0 0.0
    %1211 = vmatpush1.msra.mxu0 0.0
    %1212 = vmatprep.subr.mxu0 0.0
    %1213 = vmatpush1.msra.mxu0 0.0
    %1214 = vmatprep.subr.mxu0 0.0
    %1215 = vmatpush1.msra.mxu0 0.0
    %1216 = vmatprep.subr.mxu0 0.0
    %1217 = vmatpush1.msra.mxu0 0.0
    %1218 = vmatprep.subr.mxu0 0.0
    %1219 = vmatpush1.msra.mxu0 0.0
    %1220 = vmatprep.subr.mxu0 0.0
    %1221 = vmatpush1.msra.mxu0 0.0
    %1222 = vmatprep.subr.mxu0 0.0
    %1223 = vmatpush1.msra.mxu0 0.0
    %1224 = vmatprep.subr.mxu0 0.0
    %1225 = vmatpush1.msra.mxu0 0.0
    %1226 = vmatprep.subr.mxu0 0.0
    %1227 = vmatpush1.msra.mxu0 0.0
    %1228 = vmatprep.subr.mxu0 0.0
    %1229 = vmatpush1.msra.mxu0 0.0
    %1230 = vmatprep.subr.mxu0 0.0
    %1231 = vmatpush1.msra.mxu0 0.0
    %1232 = vmatprep.subr.mxu0 0.0
    %1233 = vmatpush1.msra.mxu0 0.0
    %1234 = vmatprep.subr.mxu0 0.0
    %1235 = vmatpush1.msra.mxu0 0.0
    %1236 = vmatprep.subr.mxu0 0.0
    %1237 = vmatpush1.msra.mxu0 0.0
    %1238 = vmatprep.subr.mxu0 0.0
    %1239 = vmatpush1.msra.mxu0 0.0
    %1240 = vmatprep.subr.mxu0 0.0
    %1241 = vmatpush1.msra.mxu0 0.0
    %1242 = vmatprep.subr.mxu0 0.0
    %1243 = vmatpush1.msra.mxu0 0.0
    %1244 = vmatprep.subr.mxu0 0.0
    %1245 = vmatpush1.msra.mxu0 0.0
    %1246 = vmatprep.subr.mxu0 0.0
    %1247 = vmatpush1.msra.mxu0 0.0
    %1248 = vmatprep.subr.mxu0 0.0
    %1249 = vmatpush1.msra.mxu0 0.0
    %1250 = vmatprep.subr.mxu0 0.0
    %1251 = vmatpush1.msra.mxu0 0.0
    %1252 = vmatprep.subr.mxu0 0.0
    %1253 = vmatpush1.msra.mxu0 0.0
    %1254 = vmatprep.mubr.f32.mxu0 0.0
    %1255 = vmatmul.mubr.f32.gmra.mrb[0].mxu0 %v1188
    %v1256 = vpop.f32.mrb[0].mxu0
    %v1257 = vadd.f32 %v1186, %v1256
    %v1258 = vpop.f32.mrb[0].mxu0
    %1259 = vdwg.mxu0
    %vm1260 = vcmask 33792
    %1261 = vst.msk [vmem:[#allocation5] sm:$0x3] %vm1260, %v1257
    // Predicated region
    $region14: #{conv_mlp_forward.1} parent=1 // pred_check
      _
    $region15: #{conv_mlp_forward.1} parent=1 // pred_check_branch
      %1263 = sbr.rel (0) target = $region17
    $region16: #{conv_mlp_forward.1} parent=1 // pred_region
      %s1265 = ssub.s32 32, 32
      %1266 = vsyncadd [#allocation4], %s1265
      %s1268 = sshll.u32 [#allocation5], 4
      %s1269 = int_to_ptr.vmem [resolvable:$true] %s1268
      %1271 = dma.vmem_to_hbm [thread:$0]  %s1269, 32, %s2, [#allocation4]
    $region17: #{conv_mlp_forward.1} parent=1 // pred_fallthru
      _
    // Predicated region
    $region18: #{conv_mlp_forward.1} parent=1 // pred_check
      _
    $region19: #{conv_mlp_forward.1} parent=1 // pred_check_branch
      %1273 = sbr.rel (0) target = $region21
    $region20: #{conv_mlp_forward.1} parent=1 // pred_region
      %1274 = dma.done [#allocation4], 32
    $region21: #{conv_mlp_forward.1} parent=1 // pred_fallthru
      _
    %1275 = vsyncpa [#allocation3], 1
    %1276 = vsyncpa [#allocation4], 1

</llo_original>
